<compile_context>
chip_gen: v7x
topology: tpu7x:2x2x1
jax: 0.10.0
libtpu: 0.0.40
codegen_flags: <defaults>
</compile_context>

<pallas_src>
import math

import jax
import jax.numpy as jnp
from jax.experimental import pallas as pl
from jax.experimental.pallas import tpu as pltpu

EPS = 1e-5  # nn.BatchNorm2d default eps

_COMPILER_PARAMS = pltpu.CompilerParams(vmem_limit_bytes=32 * 1024 * 1024)


def _vmem():
    return pl.BlockSpec(memory_space=pltpu.MemorySpace.VMEM)


# ----------------------------- Pallas kernels ------------------------------

def _bn_phase(z, gamma4, beta4, mix):
    """Training-mode BatchNorm on a phase-decomposed accumulator.

    z      : (4*C, M) f32, row = phase*C + channel, M = N*H*W (lane axis)
    gamma4 : (4*C, 1) f32, gamma replicated across the 4 phases
    beta4  : (4*C, 1) f32
    mix    : (4*C, 4*C) f32, mix[i, j] = 1 iff i % C == j % C  (phase pooling)
    Statistics per channel are pooled over all phases and all M columns.
    """
    inv = 1.0 / (4 * z.shape[1])
    ls = jnp.sum(z, axis=1, keepdims=True)            # (4C, 1) lane reduction
    ls2 = jnp.sum(z * z, axis=1, keepdims=True)
    mean = jnp.dot(mix, ls, preferred_element_type=jnp.float32) * inv
    ex2 = jnp.dot(mix, ls2, preferred_element_type=jnp.float32) * inv
    var = ex2 - mean * mean
    scale = gamma4 * jax.lax.rsqrt(var + EPS)
    shift = beta4 - mean * scale
    return z * scale + shift


def _up_stage_kernel(taps_ref, w_ref, gamma_ref, beta_ref, mix_ref, o_ref):
    """One upsample stage: single lane-dense matmul + fused BatchNorm + ReLU.

    taps_ref : (9*Cin, M) bf16   3x3 im2col of the edge-padded source image
    w_ref    : (4*Cout, 9*Cin) bf16  phase-folded upsample+pad+conv weights
    o_ref    : (4*Cout, M)       phase-decomposed stage output
    """
    acc = jnp.dot(w_ref[...], taps_ref[...], preferred_element_type=jnp.float32)
    y = _bn_phase(acc, gamma_ref[...], beta_ref[...], mix_ref[...])
    o_ref[...] = jnp.maximum(y, 0.0).astype(o_ref.dtype)   # ReLU(True)


def _stage3_joint_kernel(taps_ref, w3_ref, g3_ref, b3_ref, mix3_ref,
                         img_ref, wimg_ref, wx_ref, gj_ref, bj_ref, mixj_ref,
                         o_ref):
    """Fused: stage-3 (conv+BN+ReLU, phase form) then joint 1x1 conv + BN.

    The stage-3 activation never leaves VMEM.  The channel concat of the
    original module is replaced by  out = W_img @ img + W_x @ x  with the
    joint weights made phase-block-diagonal so everything stays in phase form.
    """
    acc = jnp.dot(w3_ref[...], taps_ref[...], preferred_element_type=jnp.float32)
    x = jnp.maximum(_bn_phase(acc, g3_ref[...], b3_ref[...], mix3_ref[...]), 0.0)

    acc2 = jnp.dot(wimg_ref[...], img_ref[...],
                   preferred_element_type=jnp.float32)
    acc2 = acc2 + jnp.dot(wx_ref[...], x.astype(wx_ref.dtype),
                          preferred_element_type=jnp.float32)
    o_ref[...] = _bn_phase(acc2, gj_ref[...], bj_ref[...],
                           mixj_ref[...]).astype(o_ref.dtype)


# --------------------------- pallas_call wrappers ---------------------------

def _up_stage(taps, st):
    cout4 = st["w"].shape[0]
    m = taps.shape[1]
    return pl.pallas_call(
        _up_stage_kernel,
        out_shape=jax.ShapeDtypeStruct((cout4, m), jnp.bfloat16),
        in_specs=[_vmem()] * 5,
        out_specs=_vmem(),
        compiler_params=_COMPILER_PARAMS,
    )(taps, st["w"], st["gamma"], st["beta"], st["mix"])


def _stage3_joint(taps, st3, img_ph, jt):
    odim4 = jt["w_img"].shape[0]
    m = taps.shape[1]
    return pl.pallas_call(
        _stage3_joint_kernel,
        out_shape=jax.ShapeDtypeStruct((odim4, m), jnp.float32),
        in_specs=[_vmem()] * 11,
        out_specs=_vmem(),
        compiler_params=_COMPILER_PARAMS,
    )(taps, st3["w"], st3["gamma"], st3["beta"], st3["mix"],
      img_ph, jt["w_img"], jt["w_x"], jt["gamma"], jt["beta"], jt["mix"])


# ------------------------------ XLA-side glue -------------------------------
# Pure data movement: edge padding + 3x3 tap packing at SOURCE resolution, and
# the depth<->space phase shuffles at the NCHW boundaries.

def _edge_taps(x_cnhw):
    """Edge-pad(1) + 3x3 im2col packed into the contraction axis.

    (C, N, H, W) -> (9*C, N*H*W) bf16; row = (a*3+b)*C + c, col = n*H*W+h*W+w.
    """
    c, n, h, w = x_cnhw.shape
    xp = jnp.pad(x_cnhw, ((0, 0), (0, 0), (1, 1), (1, 1)), mode="edge")
    t = jnp.stack([xp[:, :, a:a + h, b:b + w]
                   for a in range(3) for b in range(3)], axis=0)
    return t.reshape(9 * c, n * h * w).astype(jnp.bfloat16)


def _depth_to_space(z, cout, n, h, w):
    """(4*Cout, N*H*W) phase form -> (Cout, N, 2H, 2W)."""
    z = z.reshape(2, 2, cout, n, h, w)          # (p, q, o, n, r, s)
    z = jnp.transpose(z, (2, 3, 4, 0, 5, 1))    # (o, n, r, p, s, q)
    return z.reshape(cout, n, 2 * h, 2 * w)


def _space_to_depth(x_cnhw):
    """(C, N, 2H, 2W) -> (4*C, N*H*W) phase form (row = (2p+q)*C + c)."""
    c, n, h2, w2 = x_cnhw.shape
    h, w = h2 // 2, w2 // 2
    x = x_cnhw.reshape(c, n, h, 2, w, 2)        # (c, n, r, p, s, q)
    x = jnp.transpose(x, (3, 5, 0, 1, 2, 4))    # (p, q, c, n, r, s)
    return x.reshape(4 * c, n * h * w)


# --------------------------- Parameter preparation --------------------------

# Nearest-2x upsample + ReflectionPad(1) == edge-replicate pad of the source by
# 1; output phase p (row parity) combines kernel rows A[p][dy] for source-row
# offset dy in {0, 1} (same for columns).
_PHASE_ROWSETS = (((0,), (1, 2)),   # p = 0: dy=0 -> {a=0}, dy=1 -> {a=1,2}
                  ((0, 1), (2,)))   # p = 1: dy=0 -> {a=0,1}, dy=1 -> {a=2}


def _pack_phase_weight(w):
    """(Cout, Cin, 3, 3) -> (4*Cout, 9*Cin) phase-folded, im2col-packed."""
    cout, cin = w.shape[:2]
    blocks = []
    for p in range(2):
        for q in range(2):
            kb = jnp.zeros((cout, 3, 3, cin), w.dtype)   # (o, a, b, c)
            for dy in range(2):
                for dx in range(2):
                    kk = jnp.zeros((cout, cin), w.dtype)
                    for a in _PHASE_ROWSETS[p][dy]:
                        for b in _PHASE_ROWSETS[q][dx]:
                            kk = kk + w[:, :, a, b]
                    kb = kb.at[:, p + dy, q + dx, :].set(kk)
            blocks.append(kb.reshape(cout, 9 * cin))
    return jnp.concatenate(blocks, axis=0)               # row = (2p+q)*Cout + o


def _block_diag4(w):
    """(O, C) -> (4*O, 4*C) block-diagonal (phase-independent 1x1 conv)."""
    o, c = w.shape
    z = jnp.zeros((4, o, 4, c), w.dtype)
    for i in range(4):
        z = z.at[i, :, i, :].set(w)
    return z.reshape(4 * o, 4 * c)


def init_params(key, text_dim, img_dim, upsample_factor=3):
    """Deterministic synthetic parameters in the PyTorch module's layout."""
    up = []
    cur = text_dim
    for _ in range(upsample_factor):
        key, k1, k2, k3 = jax.random.split(key, 4)
        cout = cur // 2
        w = jax.random.normal(k1, (cout, cur, 3, 3), jnp.float32) / (3.0 * math.sqrt(cur))
        gamma = 1.0 + 0.1 * jax.random.normal(k2, (cout,), jnp.float32)
        beta = 0.1 * jax.random.normal(k3, (cout,), jnp.float32)
        up.append((w, gamma, beta))
        cur = cout
    key, k1, k2, k3 = jax.random.split(key, 4)
    cin = cur + img_dim
    wj = jax.random.normal(k1, (img_dim, cin), jnp.float32) / math.sqrt(cin)
    gj = 1.0 + 0.1 * jax.random.normal(k2, (img_dim,), jnp.float32)
    bj = 0.1 * jax.random.normal(k3, (img_dim,), jnp.float32)
    return {"up": up, "joint": (wj, gj, bj)}


def pack_params(raw):
    """Fold upsample/pad into phase kernels and pre-build BN helpers."""
    packed = {"up": []}
    for (w, gamma, beta) in raw["up"]:
        cout = w.shape[0]
        packed["up"].append(dict(
            w=_pack_phase_weight(w).astype(jnp.bfloat16),
            gamma=jnp.tile(gamma.reshape(cout, 1), (4, 1)),
            beta=jnp.tile(beta.reshape(cout, 1), (4, 1)),
            mix=jnp.tile(jnp.eye(cout, dtype=jnp.float32), (4, 4)),
        ))
    wj, gj, bj = raw["joint"]
    img_dim = wj.shape[0]
    w_img, w_x = wj[:, :img_dim], wj[:, img_dim:]   # cat([img, x]) split
    packed["joint"] = dict(
        w_img=_block_diag4(w_img).astype(jnp.bfloat16),
        w_x=_block_diag4(w_x).astype(jnp.bfloat16),
        gamma=jnp.tile(gj.reshape(img_dim, 1), (4, 1)),
        beta=jnp.tile(bj.reshape(img_dim, 1), (4, 1)),
        mix=jnp.tile(jnp.eye(img_dim, dtype=jnp.float32), (4, 4)),
    )
    return packed


# ------------------------------ Forward pass --------------------------------

@jax.jit
def multi_modal_block(packed, text_nchw, img_nchw):
    # NCHW in -> channel-major (C, N, H, W) so the flattened N*H*W axis sits on
    # the TPU lane axis inside every kernel -> NCHW out.
    x = jnp.transpose(text_nchw, (1, 0, 2, 3)).astype(jnp.float32)

    # first upsample stages: one fused phase-conv + BN + ReLU kernel each
    for st in packed["up"][:-1]:
        _, n, h, w = x.shape
        cout = st["w"].shape[0] // 4
        z = _up_stage(_edge_taps(x), st)            # (4*Cout, N*H*W) bf16
        x = _depth_to_space(z, cout, n, h, w)       # (Cout, N, 2H, 2W)

    # last upsample stage fused with the joint 1x1 conv + BN (no concat)
    st3 = packed["up"][-1]
    jt = packed["joint"]
    _, n, h, w = x.shape
    img_dim = jt["w_img"].shape[0] // 4
    img_ph = _space_to_depth(
        jnp.transpose(img_nchw, (1, 0, 2, 3)).astype(jnp.float32)
    ).astype(jnp.bfloat16)                          # (4*img_dim, N*H*W)

    out_ph = _stage3_joint(_edge_taps(x), st3, img_ph, jt)   # (4*img_dim, NHW)
    out = _depth_to_space(out_ph, img_dim, n, h, w)          # (img_dim,N,2H,2W)
    return jnp.transpose(out, (1, 0, 2, 3))                  # NCHW


# ---------------------------- Pure-JAX reference ----------------------------

@jax.jit
def reference_forward(raw, text, img):
    def bn(y, gamma, beta):
        mean = jnp.mean(y, axis=(0, 2, 3), keepdims=True)
        var = jnp.var(y, axis=(0, 2, 3), keepdims=True)
        return ((y - mean) * jax.lax.rsqrt(var + EPS)
                * gamma.reshape(1, -1, 1, 1) + beta.reshape(1, -1, 1, 1))

    x = text.astype(jnp.float32)
    for (w, gamma, beta) in raw["up"]:
        x = jnp.repeat(jnp.repeat(x, 2, axis=2), 2, axis=3)      # nearest 2x
        x = jnp.pad(x, ((0, 0), (0, 0), (1, 1), (1, 1)), mode="reflect")
        x = jax.lax.conv_general_dilated(
            x, w, (1, 1), "VALID", dimension_numbers=("NCHW", "OIHW", "NCHW"))
        x = jnp.maximum(bn(x, gamma, beta), 0.0)
    wj, gj, bj = raw["joint"]
    cat = jnp.concatenate([img.astype(jnp.float32), x], axis=1)
    y = jnp.einsum("oc,nchw->nohw", wj, cat)
    return bn(y, gj, bj)


# --------------------------------- Main -------------------------------------

if __name__ == "__main__":
    text_dim, img_dim, up_factor = 32, 8, 3
    N, Ht, Wt = 2, 4, 4
    Hi, Wi = Ht * (2 ** up_factor), Wt * (2 ** up_factor)   # 32 x 32

    key = jax.random.PRNGKey(0)
    kp, kt, ki = jax.random.split(key, 3)
    raw = init_params(kp, text_dim, img_dim, up_factor)
    packed = pack_params(raw)
    text = jax.random.normal(kt, (N, text_dim, Ht, Wt), jnp.float32)
    img = jax.random.normal(ki, (N, img_dim, Hi, Wi), jnp.float32)

    out = jax.block_until_ready(multi_modal_block(packed, text, img))

    assert out.shape == (N, img_dim, Hi, Wi), out.shape
    assert bool(jnp.all(jnp.isfinite(out)))

    ref = jax.block_until_ready(reference_forward(raw, text, img))
    max_err = float(jnp.max(jnp.abs(out - ref)))
    assert max_err < 2e-1, f"max abs error vs reference: {max_err}"

    print("KERNEL_OK")
</pallas_src>

<mosaic_0001>
module attributes {stable_mosaic.version = 11 : i64} {
  func.func @_up_stage_kernel(%arg0: memref<288x32xbf16, #tpu.memory_space<vmem>>, %arg1: memref<64x288xbf16, #tpu.memory_space<vmem>>, %arg2: memref<64x1xf32, #tpu.memory_space<vmem>>, %arg3: memref<64x1xf32, #tpu.memory_space<vmem>>, %arg4: memref<64x64xf32, #tpu.memory_space<vmem>>, %arg5: memref<64x32xbf16, #tpu.memory_space<vmem>>) attributes {dimension_semantics = [], scalar_prefetch = 0 : i64, scratch_operands = 0 : i64, tpu.core_type = #tpu.core_type<tc>} {
    %c0 = arith.constant 0 : index
    %c0_0 = arith.constant 0 : index
    %0 = vector.load %arg1[%c0, %c0_0] : memref<64x288xbf16, #tpu.memory_space<vmem>>, vector<64x288xbf16>
    %c0_1 = arith.constant 0 : index
    %c0_2 = arith.constant 0 : index
    %1 = vector.load %arg0[%c0_1, %c0_2] : memref<288x32xbf16, #tpu.memory_space<vmem>>, vector<288x32xbf16>
    %cst = arith.constant dense<0.000000e+00> : vector<64x32xf32>
    %2 = tpu.matmul %0, %1, %cst {dimension_numbers = #tpu.dot_dimension_numbers<[1], [0], [0], [1], [0, 0, 1, 1], [], []>} : vector<64x288xbf16>, vector<288x32xbf16>, vector<64x32xf32> -> vector<64x32xf32>
    %c0_3 = arith.constant 0 : index
    %c0_4 = arith.constant 0 : index
    %3 = vector.load %arg2[%c0_3, %c0_4] : memref<64x1xf32, #tpu.memory_space<vmem>>, vector<64x1xf32>
    %c0_5 = arith.constant 0 : index
    %c0_6 = arith.constant 0 : index
    %4 = vector.load %arg3[%c0_5, %c0_6] : memref<64x1xf32, #tpu.memory_space<vmem>>, vector<64x1xf32>
    %c0_7 = arith.constant 0 : index
    %c0_8 = arith.constant 0 : index
    %5 = vector.load %arg4[%c0_7, %c0_8] : memref<64x64xf32, #tpu.memory_space<vmem>>, vector<64x64xf32>
    %cst_9 = arith.constant dense<0.000000e+00> : vector<64xf32>
    %6 = vector.multi_reduction <add>, %2, %cst_9 [1] : vector<64x32xf32> to vector<64xf32>
    %7 = vector.shape_cast %6 : vector<64xf32> to vector<64x1xf32>
    %8 = arith.mulf %2, %2 : vector<64x32xf32>
    %cst_10 = arith.constant dense<0.000000e+00> : vector<64xf32>
    %9 = vector.multi_reduction <add>, %8, %cst_10 [1] : vector<64x32xf32> to vector<64xf32>
    %10 = vector.shape_cast %9 : vector<64xf32> to vector<64x1xf32>
    %cst_11 = arith.constant dense<0.000000e+00> : vector<64x1xf32>
    %11 = tpu.matmul %5, %7, %cst_11 {dimension_numbers = #tpu.dot_dimension_numbers<[1], [0], [0], [1], [0, 0, 1, 1], [], []>} : vector<64x64xf32>, vector<64x1xf32>, vector<64x1xf32> -> vector<64x1xf32>
    %cst_12 = arith.constant 7.812500e-03 : f32
    %12 = vector.broadcast %cst_12 : f32 to vector<64x1xf32>
    %13 = arith.mulf %11, %12 : vector<64x1xf32>
    %cst_13 = arith.constant dense<0.000000e+00> : vector<64x1xf32>
    %14 = tpu.matmul %5, %10, %cst_13 {dimension_numbers = #tpu.dot_dimension_numbers<[1], [0], [0], [1], [0, 0, 1, 1], [], []>} : vector<64x64xf32>, vector<64x1xf32>, vector<64x1xf32> -> vector<64x1xf32>
    %cst_14 = arith.constant 7.812500e-03 : f32
    %15 = vector.broadcast %cst_14 : f32 to vector<64x1xf32>
    %16 = arith.mulf %14, %15 : vector<64x1xf32>
    %17 = arith.mulf %13, %13 : vector<64x1xf32>
    %18 = arith.subf %16, %17 : vector<64x1xf32>
    %cst_15 = arith.constant 9.99999974E-6 : f32
    %19 = vector.broadcast %cst_15 : f32 to vector<64x1xf32>
    %20 = arith.addf %18, %19 : vector<64x1xf32>
    %21 = math.rsqrt %20 : vector<64x1xf32>
    %22 = arith.mulf %3, %21 : vector<64x1xf32>
    %23 = arith.mulf %13, %22 : vector<64x1xf32>
    %24 = arith.subf %4, %23 : vector<64x1xf32>
    %25 = vector.broadcast %22 : vector<64x1xf32> to vector<64x32xf32>
    %26 = arith.mulf %2, %25 : vector<64x32xf32>
    %27 = vector.broadcast %24 : vector<64x1xf32> to vector<64x32xf32>
    %28 = arith.addf %26, %27 : vector<64x32xf32>
    %cst_16 = arith.constant 0.000000e+00 : f32
    %29 = vector.broadcast %cst_16 : f32 to vector<64x32xf32>
    %30 = arith.maximumf %28, %29 : vector<64x32xf32>
    %31 = arith.truncf %30 : vector<64x32xf32> to vector<64x32xbf16>
    %c0_17 = arith.constant 0 : index
    %c0_18 = arith.constant 0 : index
    %32 = vector.load %arg5[%c0_17, %c0_18] : memref<64x32xbf16, #tpu.memory_space<vmem>>, vector<64x32xbf16>
    tpu.vector_store %arg5[%c0_17, %c0_18], %31 {strides = array<i32>} : memref<64x32xbf16, #tpu.memory_space<vmem>>, vector<64x32xbf16>,
    return
  }
}

module attributes {stable_mosaic.version = 11 : i64} {
  func.func @_up_stage_kernel(%arg0: memref<144x128xbf16, #tpu.memory_space<vmem>>, %arg1: memref<32x144xbf16, #tpu.memory_space<vmem>>, %arg2: memref<32x1xf32, #tpu.memory_space<vmem>>, %arg3: memref<32x1xf32, #tpu.memory_space<vmem>>, %arg4: memref<32x32xf32, #tpu.memory_space<vmem>>, %arg5: memref<32x128xbf16, #tpu.memory_space<vmem>>) attributes {dimension_semantics = [], scalar_prefetch = 0 : i64, scratch_operands = 0 : i64, tpu.core_type = #tpu.core_type<tc>} {
    %c0 = arith.constant 0 : index
    %c0_0 = arith.constant 0 : index
    %0 = vector.load %arg1[%c0, %c0_0] : memref<32x144xbf16, #tpu.memory_space<vmem>>, vector<32x144xbf16>
    %c0_1 = arith.constant 0 : index
    %c0_2 = arith.constant 0 : index
    %1 = vector.load %arg0[%c0_1, %c0_2] : memref<144x128xbf16, #tpu.memory_space<vmem>>, vector<144x128xbf16>
    %cst = arith.constant dense<0.000000e+00> : vector<32x128xf32>
    %2 = tpu.matmul %0, %1, %cst {dimension_numbers = #tpu.dot_dimension_numbers<[1], [0], [0], [1], [0, 0, 1, 1], [], []>} : vector<32x144xbf16>, vector<144x128xbf16>, vector<32x128xf32> -> vector<32x128xf32>
    %c0_3 = arith.constant 0 : index
    %c0_4 = arith.constant 0 : index
    %3 = vector.load %arg2[%c0_3, %c0_4] : memref<32x1xf32, #tpu.memory_space<vmem>>, vector<32x1xf32>
    %c0_5 = arith.constant 0 : index
    %c0_6 = arith.constant 0 : index
    %4 = vector.load %arg3[%c0_5, %c0_6] : memref<32x1xf32, #tpu.memory_space<vmem>>, vector<32x1xf32>
    %c0_7 = arith.constant 0 : index
    %c0_8 = arith.constant 0 : index
    %5 = vector.load %arg4[%c0_7, %c0_8] : memref<32x32xf32, #tpu.memory_space<vmem>>, vector<32x32xf32>
    %cst_9 = arith.constant dense<0.000000e+00> : vector<32xf32>
    %6 = vector.multi_reduction <add>, %2, %cst_9 [1] : vector<32x128xf32> to vector<32xf32>
    %7 = vector.shape_cast %6 : vector<32xf32> to vector<32x1xf32>
    %8 = arith.mulf %2, %2 : vector<32x128xf32>
    %cst_10 = arith.constant dense<0.000000e+00> : vector<32xf32>
    %9 = vector.multi_reduction <add>, %8, %cst_10 [1] : vector<32x128xf32> to vector<32xf32>
    %10 = vector.shape_cast %9 : vector<32xf32> to vector<32x1xf32>
    %cst_11 = arith.constant dense<0.000000e+00> : vector<32x1xf32>
    %11 = tpu.matmul %5, %7, %cst_11 {dimension_numbers = #tpu.dot_dimension_numbers<[1], [0], [0], [1], [0, 0, 1, 1], [], []>} : vector<32x32xf32>, vector<32x1xf32>, vector<32x1xf32> -> vector<32x1xf32>
    %cst_12 = arith.constant 0.001953125 : f32
    %12 = vector.broadcast %cst_12 : f32 to vector<32x1xf32>
    %13 = arith.mulf %11, %12 : vector<32x1xf32>
    %cst_13 = arith.constant dense<0.000000e+00> : vector<32x1xf32>
    %14 = tpu.matmul %5, %10, %cst_13 {dimension_numbers = #tpu.dot_dimension_numbers<[1], [0], [0], [1], [0, 0, 1, 1], [], []>} : vector<32x32xf32>, vector<32x1xf32>, vector<32x1xf32> -> vector<32x1xf32>
    %cst_14 = arith.constant 0.001953125 : f32
    %15 = vector.broadcast %cst_14 : f32 to vector<32x1xf32>
    %16 = arith.mulf %14, %15 : vector<32x1xf32>
    %17 = arith.mulf %13, %13 : vector<32x1xf32>
    %18 = arith.subf %16, %17 : vector<32x1xf32>
    %cst_15 = arith.constant 9.99999974E-6 : f32
    %19 = vector.broadcast %cst_15 : f32 to vector<32x1xf32>
    %20 = arith.addf %18, %19 : vector<32x1xf32>
    %21 = math.rsqrt %20 : vector<32x1xf32>
    %22 = arith.mulf %3, %21 : vector<32x1xf32>
    %23 = arith.mulf %13, %22 : vector<32x1xf32>
    %24 = arith.subf %4, %23 : vector<32x1xf32>
    %25 = vector.broadcast %22 : vector<32x1xf32> to vector<32x128xf32>
    %26 = arith.mulf %2, %25 : vector<32x128xf32>
    %27 = vector.broadcast %24 : vector<32x1xf32> to vector<32x128xf32>
    %28 = arith.addf %26, %27 : vector<32x128xf32>
    %cst_16 = arith.constant 0.000000e+00 : f32
    %29 = vector.broadcast %cst_16 : f32 to vector<32x128xf32>
    %30 = arith.maximumf %28, %29 : vector<32x128xf32>
    %31 = arith.truncf %30 : vector<32x128xf32> to vector<32x128xbf16>
    %c0_17 = arith.constant 0 : index
    %c0_18 = arith.constant 0 : index
    %32 = vector.load %arg5[%c0_17, %c0_18] : memref<32x128xbf16, #tpu.memory_space<vmem>>, vector<32x128xbf16>
    tpu.vector_store %arg5[%c0_17, %c0_18], %31 {strides = array<i32>} : memref<32x128xbf16, #tpu.memory_space<vmem>>, vector<32x128xbf16>,
    return
  }
}

module attributes {stable_mosaic.version = 11 : i64} {
  func.func @_stage3_joint_kernel(%arg0: memref<72x512xbf16, #tpu.memory_space<vmem>>, %arg1: memref<16x72xbf16, #tpu.memory_space<vmem>>, %arg2: memref<16x1xf32, #tpu.memory_space<vmem>>, %arg3: memref<16x1xf32, #tpu.memory_space<vmem>>, %arg4: memref<16x16xf32, #tpu.memory_space<vmem>>, %arg5: memref<32x512xbf16, #tpu.memory_space<vmem>>, %arg6: memref<32x32xbf16, #tpu.memory_space<vmem>>, %arg7: memref<32x16xbf16, #tpu.memory_space<vmem>>, %arg8: memref<32x1xf32, #tpu.memory_space<vmem>>, %arg9: memref<32x1xf32, #tpu.memory_space<vmem>>, %arg10: memref<32x32xf32, #tpu.memory_space<vmem>>, %arg11: memref<32x512xf32, #tpu.memory_space<vmem>>) attributes {dimension_semantics = [], scalar_prefetch = 0 : i64, scratch_operands = 0 : i64, tpu.core_type = #tpu.core_type<tc>} {
    %c0 = arith.constant 0 : index
    %c0_0 = arith.constant 0 : index
    %0 = vector.load %arg1[%c0, %c0_0] : memref<16x72xbf16, #tpu.memory_space<vmem>>, vector<16x72xbf16>
    %c0_1 = arith.constant 0 : index
    %c0_2 = arith.constant 0 : index
    %1 = vector.load %arg0[%c0_1, %c0_2] : memref<72x512xbf16, #tpu.memory_space<vmem>>, vector<72x512xbf16>
    %cst = arith.constant dense<0.000000e+00> : vector<16x512xf32>
    %2 = tpu.matmul %0, %1, %cst {dimension_numbers = #tpu.dot_dimension_numbers<[1], [0], [0], [1], [0, 0, 1, 1], [], []>} : vector<16x72xbf16>, vector<72x512xbf16>, vector<16x512xf32> -> vector<16x512xf32>
    %c0_3 = arith.constant 0 : index
    %c0_4 = arith.constant 0 : index
    %3 = vector.load %arg2[%c0_3, %c0_4] : memref<16x1xf32, #tpu.memory_space<vmem>>, vector<16x1xf32>
    %c0_5 = arith.constant 0 : index
    %c0_6 = arith.constant 0 : index
    %4 = vector.load %arg3[%c0_5, %c0_6] : memref<16x1xf32, #tpu.memory_space<vmem>>, vector<16x1xf32>
    %c0_7 = arith.constant 0 : index
    %c0_8 = arith.constant 0 : index
    %5 = vector.load %arg4[%c0_7, %c0_8] : memref<16x16xf32, #tpu.memory_space<vmem>>, vector<16x16xf32>
    %cst_9 = arith.constant dense<0.000000e+00> : vector<16xf32>
    %6 = vector.multi_reduction <add>, %2, %cst_9 [1] : vector<16x512xf32> to vector<16xf32>
    %7 = vector.shape_cast %6 : vector<16xf32> to vector<16x1xf32>
    %8 = arith.mulf %2, %2 : vector<16x512xf32>
    %cst_10 = arith.constant dense<0.000000e+00> : vector<16xf32>
    %9 = vector.multi_reduction <add>, %8, %cst_10 [1] : vector<16x512xf32> to vector<16xf32>
    %10 = vector.shape_cast %9 : vector<16xf32> to vector<16x1xf32>
    %cst_11 = arith.constant dense<0.000000e+00> : vector<16x1xf32>
    %11 = tpu.matmul %5, %7, %cst_11 {dimension_numbers = #tpu.dot_dimension_numbers<[1], [0], [0], [1], [0, 0, 1, 1], [], []>} : vector<16x16xf32>, vector<16x1xf32>, vector<16x1xf32> -> vector<16x1xf32>
    %cst_12 = arith.constant 4.8828125E-4 : f32
    %12 = vector.broadcast %cst_12 : f32 to vector<16x1xf32>
    %13 = arith.mulf %11, %12 : vector<16x1xf32>
    %cst_13 = arith.constant dense<0.000000e+00> : vector<16x1xf32>
    %14 = tpu.matmul %5, %10, %cst_13 {dimension_numbers = #tpu.dot_dimension_numbers<[1], [0], [0], [1], [0, 0, 1, 1], [], []>} : vector<16x16xf32>, vector<16x1xf32>, vector<16x1xf32> -> vector<16x1xf32>
    %cst_14 = arith.constant 4.8828125E-4 : f32
    %15 = vector.broadcast %cst_14 : f32 to vector<16x1xf32>
    %16 = arith.mulf %14, %15 : vector<16x1xf32>
    %17 = arith.mulf %13, %13 : vector<16x1xf32>
    %18 = arith.subf %16, %17 : vector<16x1xf32>
    %cst_15 = arith.constant 9.99999974E-6 : f32
    %19 = vector.broadcast %cst_15 : f32 to vector<16x1xf32>
    %20 = arith.addf %18, %19 : vector<16x1xf32>
    %21 = math.rsqrt %20 : vector<16x1xf32>
    %22 = arith.mulf %3, %21 : vector<16x1xf32>
    %23 = arith.mulf %13, %22 : vector<16x1xf32>
    %24 = arith.subf %4, %23 : vector<16x1xf32>
    %25 = vector.broadcast %22 : vector<16x1xf32> to vector<16x512xf32>
    %26 = arith.mulf %2, %25 : vector<16x512xf32>
    %27 = vector.broadcast %24 : vector<16x1xf32> to vector<16x512xf32>
    %28 = arith.addf %26, %27 : vector<16x512xf32>
    %cst_16 = arith.constant 0.000000e+00 : f32
    %29 = vector.broadcast %cst_16 : f32 to vector<16x512xf32>
    %30 = arith.maximumf %28, %29 : vector<16x512xf32>
    %c0_17 = arith.constant 0 : index
    %c0_18 = arith.constant 0 : index
    %31 = vector.load %arg6[%c0_17, %c0_18] : memref<32x32xbf16, #tpu.memory_space<vmem>>, vector<32x32xbf16>
    %c0_19 = arith.constant 0 : index
    %c0_20 = arith.constant 0 : index
    %32 = vector.load %arg5[%c0_19, %c0_20] : memref<32x512xbf16, #tpu.memory_space<vmem>>, vector<32x512xbf16>
    %cst_21 = arith.constant dense<0.000000e+00> : vector<32x512xf32>
    %33 = tpu.matmul %31, %32, %cst_21 {dimension_numbers = #tpu.dot_dimension_numbers<[1], [0], [0], [1], [0, 0, 1, 1], [], []>} : vector<32x32xbf16>, vector<32x512xbf16>, vector<32x512xf32> -> vector<32x512xf32>
    %c0_22 = arith.constant 0 : index
    %c0_23 = arith.constant 0 : index
    %34 = vector.load %arg7[%c0_22, %c0_23] : memref<32x16xbf16, #tpu.memory_space<vmem>>, vector<32x16xbf16>
    %35 = arith.truncf %30 : vector<16x512xf32> to vector<16x512xbf16>
    %cst_24 = arith.constant dense<0.000000e+00> : vector<32x512xf32>
    %36 = tpu.matmul %34, %35, %cst_24 {dimension_numbers = #tpu.dot_dimension_numbers<[1], [0], [0], [1], [0, 0, 1, 1], [], []>} : vector<32x16xbf16>, vector<16x512xbf16>, vector<32x512xf32> -> vector<32x512xf32>
    %37 = arith.addf %33, %36 : vector<32x512xf32>
    %c0_25 = arith.constant 0 : index
    %c0_26 = arith.constant 0 : index
    %38 = vector.load %arg8[%c0_25, %c0_26] : memref<32x1xf32, #tpu.memory_space<vmem>>, vector<32x1xf32>
    %c0_27 = arith.constant 0 : index
    %c0_28 = arith.constant 0 : index
    %39 = vector.load %arg9[%c0_27, %c0_28] : memref<32x1xf32, #tpu.memory_space<vmem>>, vector<32x1xf32>
    %c0_29 = arith.constant 0 : index
    %c0_30 = arith.constant 0 : index
    %40 = vector.load %arg10[%c0_29, %c0_30] : memref<32x32xf32, #tpu.memory_space<vmem>>, vector<32x32xf32>
    %cst_31 = arith.constant dense<0.000000e+00> : vector<32xf32>
    %41 = vector.multi_reduction <add>, %37, %cst_31 [1] : vector<32x512xf32> to vector<32xf32>
    %42 = vector.shape_cast %41 : vector<32xf32> to vector<32x1xf32>
    %43 = arith.mulf %37, %37 : vector<32x512xf32>
    %cst_32 = arith.constant dense<0.000000e+00> : vector<32xf32>
    %44 = vector.multi_reduction <add>, %43, %cst_32 [1] : vector<32x512xf32> to vector<32xf32>
    %45 = vector.shape_cast %44 : vector<32xf32> to vector<32x1xf32>
    %cst_33 = arith.constant dense<0.000000e+00> : vector<32x1xf32>
    %46 = tpu.matmul %40, %42, %cst_33 {dimension_numbers = #tpu.dot_dimension_numbers<[1], [0], [0], [1], [0, 0, 1, 1], [], []>} : vector<32x32xf32>, vector<32x1xf32>, vector<32x1xf32> -> vector<32x1xf32>
    %cst_34 = arith.constant 4.8828125E-4 : f32
    %47 = vector.broadcast %cst_34 : f32 to vector<32x1xf32>
    %48 = arith.mulf %46, %47 : vector<32x1xf32>
    %cst_35 = arith.constant dense<0.000000e+00> : vector<32x1xf32>
    %49 = tpu.matmul %40, %45, %cst_35 {dimension_numbers = #tpu.dot_dimension_numbers<[1], [0], [0], [1], [0, 0, 1, 1], [], []>} : vector<32x32xf32>, vector<32x1xf32>, vector<32x1xf32> -> vector<32x1xf32>
    %cst_36 = arith.constant 4.8828125E-4 : f32
    %50 = vector.broadcast %cst_36 : f32 to vector<32x1xf32>
    %51 = arith.mulf %49, %50 : vector<32x1xf32>
    %52 = arith.mulf %48, %48 : vector<32x1xf32>
    %53 = arith.subf %51, %52 : vector<32x1xf32>
    %cst_37 = arith.constant 9.99999974E-6 : f32
    %54 = vector.broadcast %cst_37 : f32 to vector<32x1xf32>
    %55 = arith.addf %53, %54 : vector<32x1xf32>
    %56 = math.rsqrt %55 : vector<32x1xf32>
    %57 = arith.mulf %38, %56 : vector<32x1xf32>
    %58 = arith.mulf %48, %57 : vector<32x1xf32>
    %59 = arith.subf %39, %58 : vector<32x1xf32>
    %60 = vector.broadcast %57 : vector<32x1xf32> to vector<32x512xf32>
    %61 = arith.mulf %37, %60 : vector<32x512xf32>
    %62 = vector.broadcast %59 : vector<32x1xf32> to vector<32x512xf32>
    %63 = arith.addf %61, %62 : vector<32x512xf32>
    %c0_38 = arith.constant 0 : index
    %c0_39 = arith.constant 0 : index
    %64 = vector.load %arg11[%c0_38, %c0_39] : memref<32x512xf32, #tpu.memory_space<vmem>>, vector<32x512xf32>
    tpu.vector_store %arg11[%c0_38, %c0_39], %63 {strides = array<i32>} : memref<32x512xf32, #tpu.memory_space<vmem>>, vector<32x512xf32>,
    return
  }
}

</mosaic_0001>

<llo_original>
// kernel: multi_modal_block.3
$region0: #{multi_modal_block.3}
  #allocation0 [shape = 'u32[]', space=smem, size = 0x4, offset = 0x4, fixed_abs, tag = 'smem constant byte address 0x4 - core index']
  #allocation1 [shape = 'u32[144,128]{1,0:T(1,128)}', space=vmem, size = 0x12000, scoped, tag = 'internal scratch']
  %s0 = inlined_call_operand.vmem [shape: bf16[288,32], index: 0, kind: input, shape index: {}]
  %s1 = inlined_call_operand.hbm [shape: bf16[64,288], index: 1, kind: input, shape index: {}]
  %s2 = inlined_call_operand.vmem [shape: f32[64,1], index: 2, kind: input, shape index: {}]
  %s3 = inlined_call_operand.vmem [shape: f32[64,1], index: 3, kind: input, shape index: {}]
  %s4 = inlined_call_operand.hbm [shape: f32[64,64], index: 4, kind: input, shape index: {}]
  %s5 = inlined_call_operand.vmem [shape: bf16[64,32], index: 5, kind: output, shape index: {}]
  %s6 = sld [smem:[#allocation0]]
  $region38: #{multi_modal_block.3} parent=0
    _
  %s8 = ssub.s32 1, %s6
  %s9 = scalar_select 0, %s8, %s6
  $region1: #{multi_modal_block.3} parent=0
    #allocation2 [shape = 'u8[49152]{0}', space=vmem, size = 0xc000, scoped, tag = 'input window, operand 1, single buffered']
    #allocation3 [shape = 's32[1]{0}', space=sflag, size = 0x4, scoped, tag = 'scoped memory for multi_modal_block.3']
    #allocation4 [shape = 'u8[32768]{0}', space=vmem, size = 0x8000, scoped, tag = 'input window, operand 4, single buffered']
    #allocation5 [shape = 's32[1]{0}', space=sflag, size = 0x4, scoped, tag = 'scoped memory for multi_modal_block.3']
    %10 = vsyncpa [#allocation3], 0
    %11 = vsyncpa [#allocation5], 0
    // Predicated region
    $region2: #{multi_modal_block.3} parent=1 // pred_check
      _
    $region3: #{multi_modal_block.3} parent=1 // pred_check_branch
      %13 = sbr.rel (0) target = $region5
    $region4: #{multi_modal_block.3} parent=1 // pred_region
      _
    $region5: #{multi_modal_block.3} parent=1 // pred_fallthru
      _
    // Predicated region
    $region6: #{multi_modal_block.3} parent=1 // pred_check
      _
    $region7: #{multi_modal_block.3} parent=1 // pred_check_branch
      %15 = sbr.rel (0) target = $region9
    $region8: #{multi_modal_block.3} parent=1 // pred_region
      %s17 = ssub.s32 1536, 1536
      %18 = vsyncadd [#allocation3], %s17
      %s19 = sshll.u32 [#allocation2], 4
      %s20 = int_to_ptr.vmem [resolvable:$true] %s19
      %25 = dma.hbm_to_vmem [thread:$0]  %s1, 1536, %s20, [#allocation3], 192, 192, 12
    $region9: #{multi_modal_block.3} parent=1 // pred_fallthru
      _
    // Predicated region
    $region10: #{multi_modal_block.3} parent=1 // pred_check
      _
    $region11: #{multi_modal_block.3} parent=1 // pred_check_branch
      %27 = sbr.rel (0) target = $region13
    $region12: #{multi_modal_block.3} parent=1 // pred_region
      _
    $region13: #{multi_modal_block.3} parent=1 // pred_fallthru
      _
    // Predicated region
    $region14: #{multi_modal_block.3} parent=1 // pred_check
      _
    $region15: #{multi_modal_block.3} parent=1 // pred_check_branch
      %29 = sbr.rel (0) target = $region17
    $region16: #{multi_modal_block.3} parent=1 // pred_region
      _
    $region17: #{multi_modal_block.3} parent=1 // pred_fallthru
      _
    // Predicated region
    $region18: #{multi_modal_block.3} parent=1 // pred_check
      _
    $region19: #{multi_modal_block.3} parent=1 // pred_check_branch
      %31 = sbr.rel (0) target = $region21
    $region20: #{multi_modal_block.3} parent=1 // pred_region
      %s33 = ssub.s32 1024, 1024
      %34 = vsyncadd [#allocation5], %s33
      %s35 = sshll.u32 [#allocation4], 4
      %s36 = int_to_ptr.vmem [resolvable:$true] %s35
      %41 = dma.hbm_to_vmem [thread:$0]  %s4, 1024, %s36, [#allocation5], 128, 128, 8
    $region21: #{multi_modal_block.3} parent=1 // pred_fallthru
      _
    // Predicated region
    $region22: #{multi_modal_block.3} parent=1 // pred_check
      _
    $region23: #{multi_modal_block.3} parent=1 // pred_check_branch
      %43 = sbr.rel (0) target = $region25
    $region24: #{multi_modal_block.3} parent=1 // pred_region
      %44 = dma.done [#allocation3], 1536
    $region25: #{multi_modal_block.3} parent=1 // pred_fallthru
      _
    // Predicated region
    $region26: #{multi_modal_block.3} parent=1 // pred_check
      _
    $region27: #{multi_modal_block.3} parent=1 // pred_check_branch
      %46 = sbr.rel (0) target = $region29
    $region28: #{multi_modal_block.3} parent=1 // pred_region
      %47 = dma.done [#allocation5], 1024
    $region29: #{multi_modal_block.3} parent=1 // pred_fallthru
      _
    %v49 = vld [vmem:[#allocation2] sm:$0xff]
    %v50 = vld [vmem:[#allocation2 + $0x8] sm:$0xf]
    %v51 = vld [vmem:[#allocation2 + $0xc] sm:$0xff]
    %v52 = vld [vmem:[#allocation2 + $0x14] sm:$0xf]
    %v53 = vld [vmem:[#allocation2 + $0x18] sm:$0xff]
    %v54 = vld [vmem:[#allocation2 + $0x20] sm:$0xf]
    %v55 = vld [vmem:[#allocation2 + $0x24] sm:$0xff]
    %v56 = vld [vmem:[#allocation2 + $0x2c] sm:$0xf]
    %v57 = vld [vmem:[#allocation2 + $0x30] sm:$0xff]
    %v58 = vld [vmem:[#allocation2 + $0x38] sm:$0xf]
    %v59 = vld [vmem:[#allocation2 + $0x3c] sm:$0xff]
    %v60 = vld [vmem:[#allocation2 + $0x44] sm:$0xf]
    %v61 = vld [vmem:[#allocation2 + $0x48] sm:$0xff]
    %v62 = vld [vmem:[#allocation2 + $0x50] sm:$0xf]
    %v63 = vld [vmem:[#allocation2 + $0x54] sm:$0xff]
    %v64 = vld [vmem:[#allocation2 + $0x5c] sm:$0xf]
    %v65 = vld [vmem:[%s0] sm:$0xf]
    %v66 = vld [vmem:[%s0 + $0x4] sm:$0xf]
    %v67 = vld [vmem:[%s0 + $0x8] sm:$0xf]
    %v68 = vld [vmem:[%s0 + $0xc] sm:$0xf]
    %v69 = vld [vmem:[%s0 + $0x10] sm:$0xf]
    %v70 = vld [vmem:[%s0 + $0x14] sm:$0xf]
    %v71 = vld [vmem:[%s0 + $0x18] sm:$0xf]
    %v72 = vld [vmem:[%s0 + $0x1c] sm:$0xf]
    %v73 = vld [vmem:[%s0 + $0x20] sm:$0xf]
    %v74 = vld [vmem:[%s0 + $0x24] sm:$0xf]
    %v75 = vld [vmem:[%s0 + $0x28] sm:$0xf]
    %v76 = vld [vmem:[%s0 + $0x2c] sm:$0xf]
    %v77 = vld [vmem:[%s0 + $0x30] sm:$0xf]
    %v78 = vld [vmem:[%s0 + $0x34] sm:$0xf]
    %v79 = vld [vmem:[%s0 + $0x38] sm:$0xf]
    %v80 = vld [vmem:[%s0 + $0x3c] sm:$0xf]
    %v81 = vld [vmem:[%s0 + $0x40] sm:$0xf]
    %v82 = vld [vmem:[%s0 + $0x44] sm:$0xf]
    %v83 = vld [vmem:[%s0 + $0x48] sm:$0xf]
    %v84 = vld [vmem:[%s0 + $0x4c] sm:$0xf]
    %v85 = vld [vmem:[%s0 + $0x50] sm:$0xf]
    %v86 = vld [vmem:[%s0 + $0x54] sm:$0xf]
    %v87 = vld [vmem:[%s0 + $0x58] sm:$0xf]
    %v88 = vld [vmem:[%s0 + $0x5c] sm:$0xf]
    %v89 = vld [vmem:[%s0 + $0x60] sm:$0xf]
    %v90 = vld [vmem:[%s0 + $0x64] sm:$0xf]
    %v91 = vld [vmem:[%s0 + $0x68] sm:$0xf]
    %v92 = vld [vmem:[%s0 + $0x6c] sm:$0xf]
    %v93 = vld [vmem:[%s0 + $0x70] sm:$0xf]
    %v94 = vld [vmem:[%s0 + $0x74] sm:$0xf]
    %v95 = vld [vmem:[%s0 + $0x78] sm:$0xf]
    %v96 = vld [vmem:[%s0 + $0x7c] sm:$0xf]
    %v97 = vld [vmem:[%s0 + $0x80] sm:$0xf]
    %v98 = vld [vmem:[%s0 + $0x84] sm:$0xf]
    %v99 = vld [vmem:[%s0 + $0x88] sm:$0xf]
    %v100 = vld [vmem:[%s0 + $0x8c] sm:$0xf]
    %v117 = vunpack.c.l.b16 %v49
    %v118 = vunpack.c.h.b16 %v49
    %v119 = vunpack.c.l.b16 %v50
    %v120 = vunpack.c.l.b16 %v51
    %v121 = vunpack.c.h.b16 %v51
    %v122 = vunpack.c.l.b16 %v52
    %v123 = vunpack.c.l.b16 %v53
    %v124 = vunpack.c.h.b16 %v53
    %v125 = vunpack.c.l.b16 %v54
    %v126 = vunpack.c.l.b16 %v55
    %v127 = vunpack.c.h.b16 %v55
    %v128 = vunpack.c.l.b16 %v56
    %v129 = vunpack.c.l.b16 %v57
    %v130 = vunpack.c.h.b16 %v57
    %v131 = vunpack.c.l.b16 %v58
    %v132 = vunpack.c.l.b16 %v59
    %v133 = vunpack.c.h.b16 %v59
    %v134 = vunpack.c.l.b16 %v60
    %v135 = vunpack.c.l.b16 %v61
    %v136 = vunpack.c.h.b16 %v61
    %v137 = vunpack.c.l.b16 %v62
    %v138 = vunpack.c.l.b16 %v63
    %v139 = vunpack.c.h.b16 %v63
    %v140 = vunpack.c.l.b16 %v64
    %v141 = vpack.c.b16 %v120, %v117
    %v142 = vpack.c.b16 %v121, %v118
    %v143 = vpack.c.b16 %v122, %v119
    %v144 = vpack.c.b16 %v126, %v123
    %v145 = vpack.c.b16 %v127, %v124
    %v146 = vpack.c.b16 %v128, %v125
    %v147 = vpack.c.b16 %v132, %v129
    %v148 = vpack.c.b16 %v133, %v130
    %v149 = vpack.c.b16 %v134, %v131
    %v150 = vpack.c.b16 %v138, %v135
    %v151 = vpack.c.b16 %v139, %v136
    %v152 = vpack.c.b16 %v140, %v137
    %v197 = vunpack.c.l.b16 %v65
    %v198 = vunpack.c.l.b16 %v66
    %v199 = vunpack.c.l.b16 %v67
    %v200 = vunpack.c.l.b16 %v68
    %v201 = vunpack.c.l.b16 %v69
    %v202 = vunpack.c.l.b16 %v70
    %v203 = vunpack.c.l.b16 %v71
    %v204 = vunpack.c.l.b16 %v72
    %v205 = vunpack.c.l.b16 %v73
    %v206 = vunpack.c.l.b16 %v74
    %v207 = vunpack.c.l.b16 %v75
    %v208 = vunpack.c.l.b16 %v76
    %v209 = vunpack.c.l.b16 %v77
    %v210 = vunpack.c.l.b16 %v78
    %v211 = vunpack.c.l.b16 %v79
    %v212 = vunpack.c.l.b16 %v80
    %v213 = vunpack.c.l.b16 %v81
    %v214 = vunpack.c.l.b16 %v82
    %v215 = vunpack.c.l.b16 %v83
    %v216 = vunpack.c.l.b16 %v84
    %v217 = vunpack.c.l.b16 %v85
    %v218 = vunpack.c.l.b16 %v86
    %v219 = vunpack.c.l.b16 %v87
    %v220 = vunpack.c.l.b16 %v88
    %v221 = vunpack.c.l.b16 %v89
    %v222 = vunpack.c.l.b16 %v90
    %v223 = vunpack.c.l.b16 %v91
    %v224 = vunpack.c.l.b16 %v92
    %v225 = vunpack.c.l.b16 %v93
    %v226 = vunpack.c.l.b16 %v94
    %v227 = vunpack.c.l.b16 %v95
    %v228 = vunpack.c.l.b16 %v96
    %v229 = vunpack.c.l.b16 %v97
    %v230 = vunpack.c.l.b16 %v98
    %v231 = vunpack.c.l.b16 %v99
    %v232 = vunpack.c.l.b16 %v100
    %v233 = vpack.c.b16 %v198, %v197
    %v234 = vpack.c.b16 %v200, %v199
    %v235 = vpack.c.b16 %v202, %v201
    %v236 = vpack.c.b16 %v204, %v203
    %v237 = vpack.c.b16 %v206, %v205
    %v238 = vpack.c.b16 %v208, %v207
    %v239 = vpack.c.b16 %v210, %v209
    %v240 = vpack.c.b16 %v212, %v211
    %v241 = vpack.c.b16 %v214, %v213
    %v242 = vpack.c.b16 %v216, %v215
    %v243 = vpack.c.b16 %v218, %v217
    %v244 = vpack.c.b16 %v220, %v219
    %v245 = vpack.c.b16 %v222, %v221
    %v246 = vpack.c.b16 %v224, %v223
    %v247 = vpack.c.b16 %v226, %v225
    %v248 = vpack.c.b16 %v228, %v227
    %v249 = vpack.c.b16 %v230, %v229
    %v250 = vpack.c.b16 %v232, %v231
    %vm269 = vcmask 261120
    %v271 = vsel %vm269, %v143, 0
    %v274 = vsel %vm269, %v146, 0
    %v277 = vsel %vm269, %v149, 0
    %v280 = vsel %vm269, %v152, 0
    %282 = vmatprep.subr.bf16.mxu0 0
    %283 = vmatpush1.bf16.msra.mxu0 %v233
    %284 = vmatprep.subr.bf16.mxu0 0
    %285 = vmatpush1.bf16.msra.mxu0 %v234
    %286 = vmatprep.subr.bf16.mxu0 0
    %287 = vmatpush1.bf16.msra.mxu0 %v235
    %288 = vmatprep.subr.bf16.mxu0 0
    %289 = vmatpush1.bf16.msra.mxu0 %v236
    %290 = vmatprep.subr.bf16.mxu0 0
    %291 = vmatpush1.bf16.msra.mxu0 %v237
    %292 = vmatprep.subr.bf16.mxu0 0
    %293 = vmatpush1.bf16.msra.mxu0 %v238
    %294 = vmatprep.subr.bf16.mxu0 0
    %295 = vmatpush1.bf16.msra.mxu0 %v239
    %296 = vmatprep.subr.bf16.mxu0 0
    %297 = vmatpush1.bf16.msra.mxu0 %v240
    %298 = vmatprep.subr.bf16.mxu0 0
    %299 = vmatpush1.bf16.msra.mxu0 %v241
    %300 = vmatprep.subr.bf16.mxu0 0
    %301 = vmatpush1.bf16.msra.mxu0 %v242
    %302 = vmatprep.subr.bf16.mxu0 0
    %303 = vmatpush1.bf16.msra.mxu0 %v243
    %304 = vmatprep.subr.bf16.mxu0 0
    %305 = vmatpush1.bf16.msra.mxu0 %v244
    %306 = vmatprep.subr.bf16.mxu0 0
    %307 = vmatpush1.bf16.msra.mxu0 %v245
    %308 = vmatprep.subr.bf16.mxu0 0
    %309 = vmatpush1.bf16.msra.mxu0 %v246
    %310 = vmatprep.subr.bf16.mxu0 0
    %311 = vmatpush1.bf16.msra.mxu0 %v247
    %312 = vmatprep.subr.bf16.mxu0 0
    %313 = vmatpush1.bf16.msra.mxu0 %v248
    %314 = vmatprep.mubr.bf16.mxu0 %v142
    %315 = vmatmul.mubr.bf16.gmra.mrb[0].mxu0 %v141
    %v316 = vpop.f32.mrb[0].mxu0
    %v317 = vadd.f32 0.0, %v316
    %v318 = vpop.f32.mrb[0].mxu0
    %v319 = vpop.f32.mrb[0].mxu0
    %v320 = vadd.f32 0.0, %v319
    %v321 = vpop.f32.mrb[0].mxu0
    %322 = vmatprep.mubr.bf16.mxu0 %v145
    %323 = vmatmul.mubr.bf16.gmra.mrb[0].mxu0 %v144
    %v324 = vpop.f32.mrb[0].mxu0
    %v325 = vadd.f32 0.0, %v324
    %v326 = vpop.f32.mrb[0].mxu0
    %v327 = vpop.f32.mrb[0].mxu0
    %v328 = vadd.f32 0.0, %v327
    %v329 = vpop.f32.mrb[0].mxu0
    %330 = vmatprep.mubr.bf16.mxu0 %v148
    %331 = vmatmul.mubr.bf16.gmra.mrb[0].mxu0 %v147
    %v332 = vpop.f32.mrb[0].mxu0
    %v333 = vadd.f32 0.0, %v332
    %v334 = vpop.f32.mrb[0].mxu0
    %v335 = vpop.f32.mrb[0].mxu0
    %v336 = vadd.f32 0.0, %v335
    %v337 = vpop.f32.mrb[0].mxu0
    %338 = vmatprep.mubr.bf16.mxu0 %v151
    %339 = vmatmul.mubr.bf16.gmra.mrb[0].mxu0 %v150
    %v340 = vpop.f32.mrb[0].mxu0
    %v341 = vadd.f32 0.0, %v340
    %v342 = vpop.f32.mrb[0].mxu0
    %v343 = vpop.f32.mrb[0].mxu0
    %v344 = vadd.f32 0.0, %v343
    %v345 = vpop.f32.mrb[0].mxu0
    %346 = vdwg.mxu0
    %347 = vmatprep.subr.bf16.mxu0 0
    %348 = vmatpush1.bf16.msra.mxu0 %v249
    %349 = vmatprep.subr.bf16.mxu0 0
    %350 = vmatpush1.bf16.msra.mxu0 %v250
    %351 = vmatprep.subr.bf16.mxu0 0
    %352 = vmatpush1.bf16.msra.mxu0 0
    %353 = vmatprep.subr.bf16.mxu0 0
    %354 = vmatpush1.bf16.msra.mxu0 0
    %355 = vmatprep.subr.bf16.mxu0 0
    %356 = vmatpush1.bf16.msra.mxu0 0
    %357 = vmatprep.subr.bf16.mxu0 0
    %358 = vmatpush1.bf16.msra.mxu0 0
    %359 = vmatprep.subr.bf16.mxu0 0
    %360 = vmatpush1.bf16.msra.mxu0 0
    %361 = vmatprep.subr.bf16.mxu0 0
    %362 = vmatpush1.bf16.msra.mxu0 0
    %363 = vmatprep.subr.bf16.mxu0 0
    %364 = vmatpush1.bf16.msra.mxu0 0
    %365 = vmatprep.subr.bf16.mxu0 0
    %366 = vmatpush1.bf16.msra.mxu0 0
    %367 = vmatprep.subr.bf16.mxu0 0
    %368 = vmatpush1.bf16.msra.mxu0 0
    %369 = vmatprep.subr.bf16.mxu0 0
    %370 = vmatpush1.bf16.msra.mxu0 0
    %371 = vmatprep.subr.bf16.mxu0 0
    %372 = vmatpush1.bf16.msra.mxu0 0
    %373 = vmatprep.subr.bf16.mxu0 0
    %374 = vmatpush1.bf16.msra.mxu0 0
    %375 = vmatprep.subr.bf16.mxu0 0
    %376 = vmatpush1.bf16.msra.mxu0 0
    %377 = vmatprep.subr.bf16.mxu0 0
    %378 = vmatpush1.bf16.msra.mxu0 0
    %379 = vmatprep.mubr.bf16.mxu0 0
    %380 = vmatmul.mubr.bf16.gmra.mrb[0].mxu0 %v271
    %v381 = vpop.f32.mrb[0].mxu0
    %v382 = vadd.f32 %v317, %v381
    %v383 = vpop.f32.mrb[0].mxu0
    %v384 = vpop.f32.mrb[0].mxu0
    %v385 = vadd.f32 %v320, %v384
    %v386 = vpop.f32.mrb[0].mxu0
    %387 = vmatprep.mubr.bf16.mxu0 0
    %388 = vmatmul.mubr.bf16.gmra.mrb[0].mxu0 %v274
    %v389 = vpop.f32.mrb[0].mxu0
    %v390 = vadd.f32 %v325, %v389
    %v391 = vpop.f32.mrb[0].mxu0
    %v392 = vpop.f32.mrb[0].mxu0
    %v393 = vadd.f32 %v328, %v392
    %v394 = vpop.f32.mrb[0].mxu0
    %395 = vmatprep.mubr.bf16.mxu0 0
    %396 = vmatmul.mubr.bf16.gmra.mrb[0].mxu0 %v277
    %v397 = vpop.f32.mrb[0].mxu0
    %v398 = vadd.f32 %v333, %v397
    %v399 = vpop.f32.mrb[0].mxu0
    %v400 = vpop.f32.mrb[0].mxu0
    %v401 = vadd.f32 %v336, %v400
    %v402 = vpop.f32.mrb[0].mxu0
    %403 = vmatprep.mubr.bf16.mxu0 0
    %404 = vmatmul.mubr.bf16.gmra.mrb[0].mxu0 %v280
    %v405 = vpop.f32.mrb[0].mxu0
    %v406 = vadd.f32 %v341, %v405
    %v407 = vpop.f32.mrb[0].mxu0
    %v408 = vpop.f32.mrb[0].mxu0
    %v409 = vadd.f32 %v344, %v408
    %v410 = vpop.f32.mrb[0].mxu0
    %411 = vdwg.mxu0
    %v412 = vld [vmem:[%s2] sm:$0xff]
    %v413 = vld [vmem:[%s2 + $0x8] sm:$0xff]
    %v414 = vld [vmem:[%s2 + $0x10] sm:$0xff]
    %v415 = vld [vmem:[%s2 + $0x18] sm:$0xff]
    %v416 = vld [vmem:[%s2 + $0x20] sm:$0xff]
    %v417 = vld [vmem:[%s2 + $0x28] sm:$0xff]
    %v418 = vld [vmem:[%s2 + $0x30] sm:$0xff]
    %v419 = vld [vmem:[%s2 + $0x38] sm:$0xff]
    %v420 = vld [vmem:[%s3] sm:$0xff]
    %v421 = vld [vmem:[%s3 + $0x8] sm:$0xff]
    %v422 = vld [vmem:[%s3 + $0x10] sm:$0xff]
    %v423 = vld [vmem:[%s3 + $0x18] sm:$0xff]
    %v424 = vld [vmem:[%s3 + $0x20] sm:$0xff]
    %v425 = vld [vmem:[%s3 + $0x28] sm:$0xff]
    %v426 = vld [vmem:[%s3 + $0x30] sm:$0xff]
    %v427 = vld [vmem:[%s3 + $0x38] sm:$0xff]
    %v428 = vld [vmem:[#allocation4] sm:$0xff]
    %v429 = vld [vmem:[#allocation4 + $0x8] sm:$0xff]
    %v430 = vld [vmem:[#allocation4 + $0x10] sm:$0xff]
    %v431 = vld [vmem:[#allocation4 + $0x18] sm:$0xff]
    %v432 = vld [vmem:[#allocation4 + $0x20] sm:$0xff]
    %v433 = vld [vmem:[#allocation4 + $0x28] sm:$0xff]
    %v434 = vld [vmem:[#allocation4 + $0x30] sm:$0xff]
    %v435 = vld [vmem:[#allocation4 + $0x38] sm:$0xff]
    %v436 = vsel %vm269, %v382, 0.0
    %437 = vadd.xlane.f32.xlu0 %v436
    %v438 = vpop.xlane.xlu0 %437
    %v439 = vsel %vm269, %v385, 0.0
    %440 = vadd.xlane.f32.xlu0 %v439
    %v441 = vpop.xlane.xlu0 %440
    %v442 = vsel %vm269, %v390, 0.0
    %443 = vadd.xlane.f32.xlu0 %v442
    %v444 = vpop.xlane.xlu0 %443
    %v445 = vsel %vm269, %v393, 0.0
    %446 = vadd.xlane.f32.xlu0 %v445
    %v447 = vpop.xlane.xlu0 %446
    %v448 = vsel %vm269, %v398, 0.0
    %449 = vadd.xlane.f32.xlu0 %v448
    %v450 = vpop.xlane.xlu0 %449
    %v451 = vsel %vm269, %v401, 0.0
    %452 = vadd.xlane.f32.xlu0 %v451
    %v453 = vpop.xlane.xlu0 %452
    %v454 = vsel %vm269, %v406, 0.0
    %455 = vadd.xlane.f32.xlu0 %v454
    %v456 = vpop.xlane.xlu0 %455
    %v457 = vsel %vm269, %v409, 0.0
    %458 = vadd.xlane.f32.xlu0 %v457
    %v459 = vpop.xlane.xlu0 %458
    %v460 = vmul.f32 %v382, %v382
    %v461 = vmul.f32 %v385, %v385
    %v462 = vmul.f32 %v390, %v390
    %v463 = vmul.f32 %v393, %v393
    %v464 = vmul.f32 %v398, %v398
    %v465 = vmul.f32 %v401, %v401
    %v466 = vmul.f32 %v406, %v406
    %v467 = vmul.f32 %v409, %v409
    %v468 = vsel %vm269, %v460, 0.0
    %469 = vadd.xlane.f32.xlu0 %v468
    %v470 = vpop.xlane.xlu0 %469
    %v471 = vsel %vm269, %v461, 0.0
    %472 = vadd.xlane.f32.xlu0 %v471
    %v473 = vpop.xlane.xlu0 %472
    %v474 = vsel %vm269, %v462, 0.0
    %475 = vadd.xlane.f32.xlu0 %v474
    %v476 = vpop.xlane.xlu0 %475
    %v477 = vsel %vm269, %v463, 0.0
    %478 = vadd.xlane.f32.xlu0 %v477
    %v479 = vpop.xlane.xlu0 %478
    %v480 = vsel %vm269, %v464, 0.0
    %481 = vadd.xlane.f32.xlu0 %v480
    %v482 = vpop.xlane.xlu0 %481
    %v483 = vsel %vm269, %v465, 0.0
    %484 = vadd.xlane.f32.xlu0 %v483
    %v485 = vpop.xlane.xlu0 %484
    %v486 = vsel %vm269, %v466, 0.0
    %487 = vadd.xlane.f32.xlu0 %v486
    %v488 = vpop.xlane.xlu0 %487
    %v489 = vsel %vm269, %v467, 0.0
    %490 = vadd.xlane.f32.xlu0 %v489
    %v491 = vpop.xlane.xlu0 %490
    %vm492 = vcmask 523264
    %v494 = vsel %vm492, %v428, 0
    %v497 = vsel %vm492, %v429, 0
    %v500 = vsel %vm492, %v430, 0
    %v503 = vsel %vm492, %v431, 0
    %v506 = vsel %vm492, %v432, 0
    %v509 = vsel %vm492, %v433, 0
    %v512 = vsel %vm492, %v434, 0
    %v515 = vsel %vm492, %v435, 0
    %517 = vmatprep.subr.mxu0 0.0
    %518 = vmatpush1.msra.mxu0 %v438
    %519 = vmatprep.subr.mxu0 0.0
    %520 = vmatpush1.msra.mxu0 %v441
    %521 = vmatprep.subr.mxu0 0.0
    %522 = vmatpush1.msra.mxu0 %v444
    %523 = vmatprep.subr.mxu0 0.0
    %524 = vmatpush1.msra.mxu0 %v447
    %525 = vmatprep.subr.mxu0 0.0
    %526 = vmatpush1.msra.mxu0 %v450
    %527 = vmatprep.subr.mxu0 0.0
    %528 = vmatpush1.msra.mxu0 %v453
    %529 = vmatprep.subr.mxu0 0.0
    %530 = vmatpush1.msra.mxu0 %v456
    %531 = vmatprep.subr.mxu0 0.0
    %532 = vmatpush1.msra.mxu0 %v459
    %533 = vmatprep.subr.mxu0 0.0
    %534 = vmatpush1.msra.mxu0 0.0
    %535 = vmatprep.subr.mxu0 0.0
    %536 = vmatpush1.msra.mxu0 0.0
    %537 = vmatprep.subr.mxu0 0.0
    %538 = vmatpush1.msra.mxu0 0.0
    %539 = vmatprep.subr.mxu0 0.0
    %540 = vmatpush1.msra.mxu0 0.0
    %541 = vmatprep.subr.mxu0 0.0
    %542 = vmatpush1.msra.mxu0 0.0
    %543 = vmatprep.subr.mxu0 0.0
    %544 = vmatpush1.msra.mxu0 0.0
    %545 = vmatprep.subr.mxu0 0.0
    %546 = vmatpush1.msra.mxu0 0.0
    %547 = vmatprep.subr.mxu0 0.0
    %548 = vmatpush1.msra.mxu0 0.0
    %549 = vmatprep.subr.mxu0 0.0
    %550 = vmatpush1.msra.mxu0 0.0
    %551 = vmatprep.subr.mxu0 0.0
    %552 = vmatpush1.msra.mxu0 0.0
    %553 = vmatprep.subr.mxu0 0.0
    %554 = vmatpush1.msra.mxu0 0.0
    %555 = vmatprep.subr.mxu0 0.0
    %556 = vmatpush1.msra.mxu0 0.0
    %557 = vmatprep.subr.mxu0 0.0
    %558 = vmatpush1.msra.mxu0 0.0
    %559 = vmatprep.subr.mxu0 0.0
    %560 = vmatpush1.msra.mxu0 0.0
    %561 = vmatprep.subr.mxu0 0.0
    %562 = vmatpush1.msra.mxu0 0.0
    %563 = vmatprep.subr.mxu0 0.0
    %564 = vmatpush1.msra.mxu0 0.0
    %565 = vmatprep.subr.mxu0 0.0
    %566 = vmatpush1.msra.mxu0 0.0
    %567 = vmatprep.subr.mxu0 0.0
    %568 = vmatpush1.msra.mxu0 0.0
    %569 = vmatprep.subr.mxu0 0.0
    %570 = vmatpush1.msra.mxu0 0.0
    %571 = vmatprep.subr.mxu0 0.0
    %572 = vmatpush1.msra.mxu0 0.0
    %573 = vmatprep.subr.mxu0 0.0
    %574 = vmatpush1.msra.mxu0 0.0
    %575 = vmatprep.subr.mxu0 0.0
    %576 = vmatpush1.msra.mxu0 0.0
    %577 = vmatprep.subr.mxu0 0.0
    %578 = vmatpush1.msra.mxu0 0.0
    %579 = vmatprep.subr.mxu0 0.0
    %580 = vmatpush1.msra.mxu0 0.0
    %581 = vmatprep.mubr.f32.mxu0 0.0
    %582 = vmatmul.mubr.f32.gmra.mrb[0].mxu0 %v494
    %v583 = vpop.f32.mrb[0].mxu0
    %v584 = vadd.f32 0.0, %v583
    %v585 = vpop.f32.mrb[0].mxu0
    %586 = vmatprep.mubr.f32.mxu0 0.0
    %587 = vmatmul.mubr.f32.gmra.mrb[0].mxu0 %v497
    %v588 = vpop.f32.mrb[0].mxu0
    %v589 = vadd.f32 0.0, %v588
    %v590 = vpop.f32.mrb[0].mxu0
    %591 = vmatprep.mubr.f32.mxu0 0.0
    %592 = vmatmul.mubr.f32.gmra.mrb[0].mxu0 %v500
    %v593 = vpop.f32.mrb[0].mxu0
    %v594 = vadd.f32 0.0, %v593
    %v595 = vpop.f32.mrb[0].mxu0
    %596 = vmatprep.mubr.f32.mxu0 0.0
    %597 = vmatmul.mubr.f32.gmra.mrb[0].mxu0 %v503
    %v598 = vpop.f32.mrb[0].mxu0
    %v599 = vadd.f32 0.0, %v598
    %v600 = vpop.f32.mrb[0].mxu0
    %601 = vmatprep.mubr.f32.mxu0 0.0
    %602 = vmatmul.mubr.f32.gmra.mrb[0].mxu0 %v506
    %v603 = vpop.f32.mrb[0].mxu0
    %v604 = vadd.f32 0.0, %v603
    %v605 = vpop.f32.mrb[0].mxu0
    %606 = vmatprep.mubr.f32.mxu0 0.0
    %607 = vmatmul.mubr.f32.gmra.mrb[0].mxu0 %v509
    %v608 = vpop.f32.mrb[0].mxu0
    %v609 = vadd.f32 0.0, %v608
    %v610 = vpop.f32.mrb[0].mxu0
    %611 = vmatprep.mubr.f32.mxu0 0.0
    %612 = vmatmul.mubr.f32.gmra.mrb[0].mxu0 %v512
    %v613 = vpop.f32.mrb[0].mxu0
    %v614 = vadd.f32 0.0, %v613
    %v615 = vpop.f32.mrb[0].mxu0
    %616 = vmatprep.mubr.f32.mxu0 0.0
    %617 = vmatmul.mubr.f32.gmra.mrb[0].mxu0 %v515
    %v618 = vpop.f32.mrb[0].mxu0
    %v619 = vadd.f32 0.0, %v618
    %v620 = vpop.f32.mrb[0].mxu0
    %621 = vdwg.mxu0
    %v622 = vmul.f32 %v584, 0.0078125
    %v623 = vmul.f32 %v589, 0.0078125
    %v624 = vmul.f32 %v594, 0.0078125
    %v625 = vmul.f32 %v599, 0.0078125
    %v626 = vmul.f32 %v604, 0.0078125
    %v627 = vmul.f32 %v609, 0.0078125
    %v628 = vmul.f32 %v614, 0.0078125
    %v629 = vmul.f32 %v619, 0.0078125
    %630 = vmatprep.subr.mxu0 0.0
    %631 = vmatpush1.msra.mxu0 %v470
    %632 = vmatprep.subr.mxu0 0.0
    %633 = vmatpush1.msra.mxu0 %v473
    %634 = vmatprep.subr.mxu0 0.0
    %635 = vmatpush1.msra.mxu0 %v476
    %636 = vmatprep.subr.mxu0 0.0
    %637 = vmatpush1.msra.mxu0 %v479
    %638 = vmatprep.subr.mxu0 0.0
    %639 = vmatpush1.msra.mxu0 %v482
    %640 = vmatprep.subr.mxu0 0.0
    %641 = vmatpush1.msra.mxu0 %v485
    %642 = vmatprep.subr.mxu0 0.0
    %643 = vmatpush1.msra.mxu0 %v488
    %644 = vmatprep.subr.mxu0 0.0
    %645 = vmatpush1.msra.mxu0 %v491
    %646 = vmatprep.subr.mxu0 0.0
    %647 = vmatpush1.msra.mxu0 0.0
    %648 = vmatprep.subr.mxu0 0.0
    %649 = vmatpush1.msra.mxu0 0.0
    %650 = vmatprep.subr.mxu0 0.0
    %651 = vmatpush1.msra.mxu0 0.0
    %652 = vmatprep.subr.mxu0 0.0
    %653 = vmatpush1.msra.mxu0 0.0
    %654 = vmatprep.subr.mxu0 0.0
    %655 = vmatpush1.msra.mxu0 0.0
    %656 = vmatprep.subr.mxu0 0.0
    %657 = vmatpush1.msra.mxu0 0.0
    %658 = vmatprep.subr.mxu0 0.0
    %659 = vmatpush1.msra.mxu0 0.0
    %660 = vmatprep.subr.mxu0 0.0
    %661 = vmatpush1.msra.mxu0 0.0
    %662 = vmatprep.subr.mxu0 0.0
    %663 = vmatpush1.msra.mxu0 0.0
    %664 = vmatprep.subr.mxu0 0.0
    %665 = vmatpush1.msra.mxu0 0.0
    %666 = vmatprep.subr.mxu0 0.0
    %667 = vmatpush1.msra.mxu0 0.0
    %668 = vmatprep.subr.mxu0 0.0
    %669 = vmatpush1.msra.mxu0 0.0
    %670 = vmatprep.subr.mxu0 0.0
    %671 = vmatpush1.msra.mxu0 0.0
    %672 = vmatprep.subr.mxu0 0.0
    %673 = vmatpush1.msra.mxu0 0.0
    %674 = vmatprep.subr.mxu0 0.0
    %675 = vmatpush1.msra.mxu0 0.0
    %676 = vmatprep.subr.mxu0 0.0
    %677 = vmatpush1.msra.mxu0 0.0
    %678 = vmatprep.subr.mxu0 0.0
    %679 = vmatpush1.msra.mxu0 0.0
    %680 = vmatprep.subr.mxu0 0.0
    %681 = vmatpush1.msra.mxu0 0.0
    %682 = vmatprep.subr.mxu0 0.0
    %683 = vmatpush1.msra.mxu0 0.0
    %684 = vmatprep.subr.mxu0 0.0
    %685 = vmatpush1.msra.mxu0 0.0
    %686 = vmatprep.subr.mxu0 0.0
    %687 = vmatpush1.msra.mxu0 0.0
    %688 = vmatprep.subr.mxu0 0.0
    %689 = vmatpush1.msra.mxu0 0.0
    %690 = vmatprep.subr.mxu0 0.0
    %691 = vmatpush1.msra.mxu0 0.0
    %692 = vmatprep.subr.mxu0 0.0
    %693 = vmatpush1.msra.mxu0 0.0
    %694 = vmatprep.mubr.f32.mxu0 0.0
    %695 = vmatmul.mubr.f32.gmra.mrb[0].mxu0 %v494
    %v696 = vpop.f32.mrb[0].mxu0
    %v697 = vadd.f32 0.0, %v696
    %v698 = vpop.f32.mrb[0].mxu0
    %699 = vmatprep.mubr.f32.mxu0 0.0
    %700 = vmatmul.mubr.f32.gmra.mrb[0].mxu0 %v497
    %v701 = vpop.f32.mrb[0].mxu0
    %v702 = vadd.f32 0.0, %v701
    %v703 = vpop.f32.mrb[0].mxu0
    %704 = vmatprep.mubr.f32.mxu0 0.0
    %705 = vmatmul.mubr.f32.gmra.mrb[0].mxu0 %v500
    %v706 = vpop.f32.mrb[0].mxu0
    %v707 = vadd.f32 0.0, %v706
    %v708 = vpop.f32.mrb[0].mxu0
    %709 = vmatprep.mubr.f32.mxu0 0.0
    %710 = vmatmul.mubr.f32.gmra.mrb[0].mxu0 %v503
    %v711 = vpop.f32.mrb[0].mxu0
    %v712 = vadd.f32 0.0, %v711
    %v713 = vpop.f32.mrb[0].mxu0
    %714 = vmatprep.mubr.f32.mxu0 0.0
    %715 = vmatmul.mubr.f32.gmra.mrb[0].mxu0 %v506
    %v716 = vpop.f32.mrb[0].mxu0
    %v717 = vadd.f32 0.0, %v716
    %v718 = vpop.f32.mrb[0].mxu0
    %719 = vmatprep.mubr.f32.mxu0 0.0
    %720 = vmatmul.mubr.f32.gmra.mrb[0].mxu0 %v509
    %v721 = vpop.f32.mrb[0].mxu0
    %v722 = vadd.f32 0.0, %v721
    %v723 = vpop.f32.mrb[0].mxu0
    %724 = vmatprep.mubr.f32.mxu0 0.0
    %725 = vmatmul.mubr.f32.gmra.mrb[0].mxu0 %v512
    %v726 = vpop.f32.mrb[0].mxu0
    %v727 = vadd.f32 0.0, %v726
    %v728 = vpop.f32.mrb[0].mxu0
    %729 = vmatprep.mubr.f32.mxu0 0.0
    %730 = vmatmul.mubr.f32.gmra.mrb[0].mxu0 %v515
    %v731 = vpop.f32.mrb[0].mxu0
    %v732 = vadd.f32 0.0, %v731
    %v733 = vpop.f32.mrb[0].mxu0
    %734 = vdwg.mxu0
    %v735 = vmul.f32 %v697, 0.0078125
    %v736 = vmul.f32 %v702, 0.0078125
    %v737 = vmul.f32 %v707, 0.0078125
    %v738 = vmul.f32 %v712, 0.0078125
    %v739 = vmul.f32 %v717, 0.0078125
    %v740 = vmul.f32 %v722, 0.0078125
    %v741 = vmul.f32 %v727, 0.0078125
    %v742 = vmul.f32 %v732, 0.0078125
    %v743 = vmul.f32 %v622, %v622
    %v744 = vmul.f32 %v623, %v623
    %v745 = vmul.f32 %v624, %v624
    %v746 = vmul.f32 %v625, %v625
    %v747 = vmul.f32 %v626, %v626
    %v748 = vmul.f32 %v627, %v627
    %v749 = vmul.f32 %v628, %v628
    %v750 = vmul.f32 %v629, %v629
    %v751 = vsub.f32 %v735, %v743
    %v752 = vsub.f32 %v736, %v744
    %v753 = vsub.f32 %v737, %v745
    %v754 = vsub.f32 %v738, %v746
    %v755 = vsub.f32 %v739, %v747
    %v756 = vsub.f32 %v740, %v748
    %v757 = vsub.f32 %v741, %v749
    %v758 = vsub.f32 %v742, %v750
    %v759 = vadd.f32 %v751, 1e-05
    %v760 = vadd.f32 %v752, 1e-05
    %v761 = vadd.f32 %v753, 1e-05
    %v762 = vadd.f32 %v754, 1e-05
    %v763 = vadd.f32 %v755, 1e-05
    %v764 = vadd.f32 %v756, 1e-05
    %v765 = vadd.f32 %v757, 1e-05
    %v766 = vadd.f32 %v758, 1e-05
    %v767 = vrsqrt.pop %v759
    %v768 = vrsqrt.pop %v760
    %v769 = vrsqrt.pop %v761
    %v770 = vrsqrt.pop %v762
    %v771 = vrsqrt.pop %v763
    %v772 = vrsqrt.pop %v764
    %v773 = vrsqrt.pop %v765
    %v774 = vrsqrt.pop %v766
    %v775 = vmul.f32 %v412, %v767
    %v776 = vmul.f32 %v413, %v768
    %v777 = vmul.f32 %v414, %v769
    %v778 = vmul.f32 %v415, %v770
    %v779 = vmul.f32 %v416, %v771
    %v780 = vmul.f32 %v417, %v772
    %v781 = vmul.f32 %v418, %v773
    %v782 = vmul.f32 %v419, %v774
    %v783 = vmul.f32 %v622, %v775
    %v784 = vmul.f32 %v623, %v776
    %v785 = vmul.f32 %v624, %v777
    %v786 = vmul.f32 %v625, %v778
    %v787 = vmul.f32 %v626, %v779
    %v788 = vmul.f32 %v627, %v780
    %v789 = vmul.f32 %v628, %v781
    %v790 = vmul.f32 %v629, %v782
    %v791 = vsub.f32 %v420, %v783
    %v792 = vsub.f32 %v421, %v784
    %v793 = vsub.f32 %v422, %v785
    %v794 = vsub.f32 %v423, %v786
    %v795 = vsub.f32 %v424, %v787
    %v796 = vsub.f32 %v425, %v788
    %v797 = vsub.f32 %v426, %v789
    %v798 = vsub.f32 %v427, %v790
    %800 = vset.pattern.permute.xlu0 0
    %801 = vperm.xlu0 %800, %v775
    %v802 = vpop.permute.xlu0 %801
    %805 = vset.pattern.permute.xlu0 0
    %806 = vperm.xlu0 %805, %v776
    %v807 = vpop.permute.xlu0 %806
    %810 = vset.pattern.permute.xlu0 0
    %811 = vperm.xlu0 %810, %v777
    %v812 = vpop.permute.xlu0 %811
    %815 = vset.pattern.permute.xlu0 0
    %816 = vperm.xlu0 %815, %v778
    %v817 = vpop.permute.xlu0 %816
    %820 = vset.pattern.permute.xlu0 0
    %821 = vperm.xlu0 %820, %v779
    %v822 = vpop.permute.xlu0 %821
    %825 = vset.pattern.permute.xlu0 0
    %826 = vperm.xlu0 %825, %v780
    %v827 = vpop.permute.xlu0 %826
    %830 = vset.pattern.permute.xlu0 0
    %831 = vperm.xlu0 %830, %v781
    %v832 = vpop.permute.xlu0 %831
    %835 = vset.pattern.permute.xlu0 0
    %836 = vperm.xlu0 %835, %v782
    %v837 = vpop.permute.xlu0 %836
    %v839 = vmul.f32 %v382, %v802
    %v840 = vmul.f32 %v385, %v807
    %v841 = vmul.f32 %v390, %v812
    %v842 = vmul.f32 %v393, %v817
    %v843 = vmul.f32 %v398, %v822
    %v844 = vmul.f32 %v401, %v827
    %v845 = vmul.f32 %v406, %v832
    %v846 = vmul.f32 %v409, %v837
    %848 = vset.pattern.permute.xlu0 0
    %849 = vperm.xlu0 %848, %v791
    %v850 = vpop.permute.xlu0 %849
    %853 = vset.pattern.permute.xlu0 0
    %854 = vperm.xlu0 %853, %v792
    %v855 = vpop.permute.xlu0 %854
    %858 = vset.pattern.permute.xlu0 0
    %859 = vperm.xlu0 %858, %v793
    %v860 = vpop.permute.xlu0 %859
    %863 = vset.pattern.permute.xlu0 0
    %864 = vperm.xlu0 %863, %v794
    %v865 = vpop.permute.xlu0 %864
    %868 = vset.pattern.permute.xlu0 0
    %869 = vperm.xlu0 %868, %v795
    %v870 = vpop.permute.xlu0 %869
    %873 = vset.pattern.permute.xlu0 0
    %874 = vperm.xlu0 %873, %v796
    %v875 = vpop.permute.xlu0 %874
    %878 = vset.pattern.permute.xlu0 0
    %879 = vperm.xlu0 %878, %v797
    %v880 = vpop.permute.xlu0 %879
    %883 = vset.pattern.permute.xlu0 0
    %884 = vperm.xlu0 %883, %v798
    %v885 = vpop.permute.xlu0 %884
    %v887 = vadd.f32 %v839, %v850
    %v888 = vadd.f32 %v840, %v855
    %v889 = vadd.f32 %v841, %v860
    %v890 = vadd.f32 %v842, %v865
    %v891 = vadd.f32 %v843, %v870
    %v892 = vadd.f32 %v844, %v875
    %v893 = vadd.f32 %v845, %v880
    %v894 = vadd.f32 %v846, %v885
    %v895 = vmax.f32 %v887, 0.0
    %v896 = vmax.f32 %v888, 0.0
    %v897 = vmax.f32 %v889, 0.0
    %v898 = vmax.f32 %v890, 0.0
    %v899 = vmax.f32 %v891, 0.0
    %v900 = vmax.f32 %v892, 0.0
    %v901 = vmax.f32 %v893, 0.0
    %v902 = vmax.f32 %v894, 0.0
    %v903 = vpack.c.bf16 %v896, %v895
    %v904 = vpack.c.bf16 %v898, %v897
    %v905 = vpack.c.bf16 %v900, %v899
    %v906 = vpack.c.bf16 %v902, %v901
    %v911 = vunpack.c.l.b16 %v903
    %v912 = vunpack.c.h.b16 %v903
    %v913 = vunpack.c.l.b16 %v904
    %v914 = vunpack.c.h.b16 %v904
    %v915 = vunpack.c.l.b16 %v905
    %v916 = vunpack.c.h.b16 %v905
    %v917 = vunpack.c.l.b16 %v906
    %v918 = vunpack.c.h.b16 %v906
    %v919 = vpack.c.b16 %v911, %v911
    %v920 = vpack.c.b16 %v912, %v912
    %v921 = vpack.c.b16 %v913, %v913
    %v922 = vpack.c.b16 %v914, %v914
    %v923 = vpack.c.b16 %v915, %v915
    %v924 = vpack.c.b16 %v916, %v916
    %v925 = vpack.c.b16 %v917, %v917
    %v926 = vpack.c.b16 %v918, %v918
    %vm935 = vcmask 257024
    %936 = vst.msk [vmem:[%s5] sm:$0xf] %vm935, %v919
    %937 = vst.msk [vmem:[%s5 + $0x4] sm:$0xf] %vm935, %v920
    %938 = vst.msk [vmem:[%s5 + $0x8] sm:$0xf] %vm935, %v921
    %939 = vst.msk [vmem:[%s5 + $0xc] sm:$0xf] %vm935, %v922
    %940 = vst.msk [vmem:[%s5 + $0x10] sm:$0xf] %vm935, %v923
    %941 = vst.msk [vmem:[%s5 + $0x14] sm:$0xf] %vm935, %v924
    %942 = vst.msk [vmem:[%s5 + $0x18] sm:$0xf] %vm935, %v925
    %943 = vst.msk [vmem:[%s5 + $0x1c] sm:$0xf] %vm935, %v926
    // Predicated region
    $region30: #{multi_modal_block.3} parent=1 // pred_check
      _
    $region31: #{multi_modal_block.3} parent=1 // pred_check_branch
      %945 = sbr.rel (0) target = $region33
    $region32: #{multi_modal_block.3} parent=1 // pred_region
      _
    $region33: #{multi_modal_block.3} parent=1 // pred_fallthru
      _
    // Predicated region
    $region34: #{multi_modal_block.3} parent=1 // pred_check
      _
    $region35: #{multi_modal_block.3} parent=1 // pred_check_branch
      %947 = sbr.rel (0) target = $region37
    $region36: #{multi_modal_block.3} parent=1 // pred_region
      _
    $region37: #{multi_modal_block.3} parent=1 // pred_fallthru
      _
    %948 = vsyncpa [#allocation3], 1
    %949 = vsyncpa [#allocation5], 1

// kernel: multi_modal_block.4
$region0: #{multi_modal_block.4}
  #allocation0 [shape = 'u32[]', space=smem, size = 0x4, offset = 0x4, fixed_abs, tag = 'smem constant byte address 0x4 - core index']
  #allocation1 [shape = 'u32[144,128]{1,0:T(1,128)}', space=vmem, size = 0x12000, scoped, tag = 'internal scratch']
  %s0 = inlined_call_operand.vmem [shape: bf16[144,128], index: 0, kind: input, shape index: {}]
  %s1 = inlined_call_operand.vmem [shape: bf16[32,144], index: 1, kind: input, shape index: {}]
  %s2 = inlined_call_operand.vmem [shape: f32[32,1], index: 2, kind: input, shape index: {}]
  %s3 = inlined_call_operand.vmem [shape: f32[32,1], index: 3, kind: input, shape index: {}]
  %s4 = inlined_call_operand.vmem [shape: f32[32,32], index: 4, kind: input, shape index: {}]
  %s5 = inlined_call_operand.vmem [shape: bf16[32,128], index: 5, kind: output, shape index: {}]
  %s6 = sld [smem:[#allocation0]]
  $region30: #{multi_modal_block.4} parent=0
    _
  %s8 = ssub.s32 1, %s6
  %s9 = scalar_select 0, %s8, %s6
  // Predicated region
  $region2: #{multi_modal_block.4} parent=0 // pred_check
    _
  $region3: #{multi_modal_block.4} parent=0 // pred_check_branch
    %11 = sbr.rel (0) target = $region5
  $region4: #{multi_modal_block.4} parent=0 // pred_region
    _
  $region5: #{multi_modal_block.4} parent=0 // pred_fallthru
    _
  // Predicated region
  $region6: #{multi_modal_block.4} parent=0 // pred_check
    _
  $region7: #{multi_modal_block.4} parent=0 // pred_check_branch
    %13 = sbr.rel (0) target = $region9
  $region8: #{multi_modal_block.4} parent=0 // pred_region
    _
  $region9: #{multi_modal_block.4} parent=0 // pred_fallthru
    _
  // Predicated region
  $region10: #{multi_modal_block.4} parent=0 // pred_check
    _
  $region11: #{multi_modal_block.4} parent=0 // pred_check_branch
    %15 = sbr.rel (0) target = $region13
  $region12: #{multi_modal_block.4} parent=0 // pred_region
    _
  $region13: #{multi_modal_block.4} parent=0 // pred_fallthru
    _
  // Predicated region
  $region14: #{multi_modal_block.4} parent=0 // pred_check
    _
  $region15: #{multi_modal_block.4} parent=0 // pred_check_branch
    %17 = sbr.rel (0) target = $region17
  $region16: #{multi_modal_block.4} parent=0 // pred_region
    _
  $region17: #{multi_modal_block.4} parent=0 // pred_fallthru
    _
  // Predicated region
  $region18: #{multi_modal_block.4} parent=0 // pred_check
    _
  $region19: #{multi_modal_block.4} parent=0 // pred_check_branch
    %19 = sbr.rel (0) target = $region21
  $region20: #{multi_modal_block.4} parent=0 // pred_region
    _
  $region21: #{multi_modal_block.4} parent=0 // pred_fallthru
    _
  %v21 = vld [vmem:[%s1] sm:$0xff]
  %v22 = vld [vmem:[%s1 + $0x8] sm:$0xff]
  %v23 = vld [vmem:[%s1 + $0x10] sm:$0xff]
  %v24 = vld [vmem:[%s1 + $0x18] sm:$0xff]
  %v25 = vld [vmem:[%s0] sm:$0xf]
  %v26 = vld [vmem:[%s0 + $0x4] sm:$0xf]
  %v27 = vld [vmem:[%s0 + $0x8] sm:$0xf]
  %v28 = vld [vmem:[%s0 + $0xc] sm:$0xf]
  %v29 = vld [vmem:[%s0 + $0x10] sm:$0xf]
  %v30 = vld [vmem:[%s0 + $0x14] sm:$0xf]
  %v31 = vld [vmem:[%s0 + $0x18] sm:$0xf]
  %v32 = vld [vmem:[%s0 + $0x1c] sm:$0xf]
  %v33 = vld [vmem:[%s0 + $0x20] sm:$0xf]
  %v34 = vld [vmem:[%s0 + $0x24] sm:$0xf]
  %v35 = vld [vmem:[%s0 + $0x28] sm:$0xf]
  %v36 = vld [vmem:[%s0 + $0x2c] sm:$0xf]
  %v37 = vld [vmem:[%s0 + $0x30] sm:$0xf]
  %v38 = vld [vmem:[%s0 + $0x34] sm:$0xf]
  %v39 = vld [vmem:[%s0 + $0x38] sm:$0xf]
  %v40 = vld [vmem:[%s0 + $0x3c] sm:$0xf]
  %v41 = vld [vmem:[%s0 + $0x40] sm:$0xf]
  %v42 = vld [vmem:[%s0 + $0x44] sm:$0xf]
  %v47 = vunpack.c.l.b16 %v21
  %v48 = vunpack.c.h.b16 %v21
  %v49 = vunpack.c.l.b16 %v22
  %v50 = vunpack.c.h.b16 %v22
  %v51 = vunpack.c.l.b16 %v23
  %v52 = vunpack.c.h.b16 %v23
  %v53 = vunpack.c.l.b16 %v24
  %v54 = vunpack.c.h.b16 %v24
  %v55 = vpack.c.b16 %v49, %v47
  %v56 = vpack.c.b16 %v50, %v48
  %v57 = vpack.c.b16 %v53, %v51
  %v58 = vpack.c.b16 %v54, %v52
  %v79 = vunpack.c.l.b16 %v25
  %v80 = vunpack.c.l.b16 %v26
  %v81 = vunpack.c.l.b16 %v27
  %v82 = vunpack.c.l.b16 %v28
  %v83 = vunpack.c.l.b16 %v29
  %v84 = vunpack.c.l.b16 %v30
  %v85 = vunpack.c.l.b16 %v31
  %v86 = vunpack.c.l.b16 %v32
  %v87 = vunpack.c.l.b16 %v33
  %v88 = vunpack.c.l.b16 %v34
  %v89 = vunpack.c.l.b16 %v35
  %v90 = vunpack.c.l.b16 %v36
  %v91 = vunpack.c.l.b16 %v37
  %v92 = vunpack.c.l.b16 %v38
  %v93 = vunpack.c.l.b16 %v39
  %v94 = vunpack.c.l.b16 %v40
  %v95 = vunpack.c.l.b16 %v41
  %v96 = vunpack.c.l.b16 %v42
  %v97 = vpack.c.b16 %v80, %v79
  %v98 = vpack.c.b16 %v82, %v81
  %v99 = vpack.c.b16 %v84, %v83
  %v100 = vpack.c.b16 %v86, %v85
  %v101 = vpack.c.b16 %v88, %v87
  %v102 = vpack.c.b16 %v90, %v89
  %v103 = vpack.c.b16 %v92, %v91
  %v104 = vpack.c.b16 %v94, %v93
  %v105 = vpack.c.b16 %v96, %v95
  %vm115 = vcmask 130048
  %v117 = vsel %vm115, %v56, 0
  %v120 = vsel %vm115, %v58, 0
  %122 = vmatprep.subr.bf16.mxu0 0
  %123 = vmatpush1.bf16.msra.mxu0 %v97
  %124 = vmatprep.subr.bf16.mxu0 0
  %125 = vmatpush1.bf16.msra.mxu0 %v98
  %126 = vmatprep.subr.bf16.mxu0 0
  %127 = vmatpush1.bf16.msra.mxu0 %v99
  %128 = vmatprep.subr.bf16.mxu0 0
  %129 = vmatpush1.bf16.msra.mxu0 %v100
  %130 = vmatprep.subr.bf16.mxu0 0
  %131 = vmatpush1.bf16.msra.mxu0 %v101
  %132 = vmatprep.subr.bf16.mxu0 0
  %133 = vmatpush1.bf16.msra.mxu0 %v102
  %134 = vmatprep.subr.bf16.mxu0 0
  %135 = vmatpush1.bf16.msra.mxu0 %v103
  %136 = vmatprep.subr.bf16.mxu0 0
  %137 = vmatpush1.bf16.msra.mxu0 %v104
  %138 = vmatprep.subr.bf16.mxu0 0
  %139 = vmatpush1.bf16.msra.mxu0 %v105
  %140 = vmatprep.subr.bf16.mxu0 0
  %141 = vmatpush1.bf16.msra.mxu0 0
  %142 = vmatprep.subr.bf16.mxu0 0
  %143 = vmatpush1.bf16.msra.mxu0 0
  %144 = vmatprep.subr.bf16.mxu0 0
  %145 = vmatpush1.bf16.msra.mxu0 0
  %146 = vmatprep.subr.bf16.mxu0 0
  %147 = vmatpush1.bf16.msra.mxu0 0
  %148 = vmatprep.subr.bf16.mxu0 0
  %149 = vmatpush1.bf16.msra.mxu0 0
  %150 = vmatprep.subr.bf16.mxu0 0
  %151 = vmatpush1.bf16.msra.mxu0 0
  %152 = vmatprep.subr.bf16.mxu0 0
  %153 = vmatpush1.bf16.msra.mxu0 0
  %154 = vmatprep.mubr.bf16.mxu0 %v117
  %155 = vmatmul.mubr.bf16.gmra.mrb[0].mxu0 %v55
  %v156 = vpop.f32.mrb[0].mxu0
  %v157 = vadd.f32 0.0, %v156
  %v158 = vpop.f32.mrb[0].mxu0
  %v159 = vpop.f32.mrb[0].mxu0
  %v160 = vadd.f32 0.0, %v159
  %v161 = vpop.f32.mrb[0].mxu0
  %162 = vmatprep.mubr.bf16.mxu0 %v120
  %163 = vmatmul.mubr.bf16.gmra.mrb[0].mxu0 %v57
  %v164 = vpop.f32.mrb[0].mxu0
  %v165 = vadd.f32 0.0, %v164
  %v166 = vpop.f32.mrb[0].mxu0
  %v167 = vpop.f32.mrb[0].mxu0
  %v168 = vadd.f32 0.0, %v167
  %v169 = vpop.f32.mrb[0].mxu0
  %170 = vdwg.mxu0
  %v171 = vld [vmem:[%s2] sm:$0xff]
  %v172 = vld [vmem:[%s2 + $0x8] sm:$0xff]
  %v173 = vld [vmem:[%s2 + $0x10] sm:$0xff]
  %v174 = vld [vmem:[%s2 + $0x18] sm:$0xff]
  %v175 = vld [vmem:[%s3] sm:$0xff]
  %v176 = vld [vmem:[%s3 + $0x8] sm:$0xff]
  %v177 = vld [vmem:[%s3 + $0x10] sm:$0xff]
  %v178 = vld [vmem:[%s3 + $0x18] sm:$0xff]
  %v179 = vld [vmem:[%s4] sm:$0xff]
  %v180 = vld [vmem:[%s4 + $0x8] sm:$0xff]
  %v181 = vld [vmem:[%s4 + $0x10] sm:$0xff]
  %v182 = vld [vmem:[%s4 + $0x18] sm:$0xff]
  %183 = vadd.xlane.f32.xlu0 %v157
  %v184 = vpop.xlane.xlu0 %183
  %185 = vadd.xlane.f32.xlu0 %v160
  %v186 = vpop.xlane.xlu0 %185
  %187 = vadd.xlane.f32.xlu0 %v165
  %v188 = vpop.xlane.xlu0 %187
  %189 = vadd.xlane.f32.xlu0 %v168
  %v190 = vpop.xlane.xlu0 %189
  %v191 = vmul.f32 %v157, %v157
  %v192 = vmul.f32 %v160, %v160
  %v193 = vmul.f32 %v165, %v165
  %v194 = vmul.f32 %v168, %v168
  %195 = vadd.xlane.f32.xlu0 %v191
  %v196 = vpop.xlane.xlu0 %195
  %197 = vadd.xlane.f32.xlu0 %v192
  %v198 = vpop.xlane.xlu0 %197
  %199 = vadd.xlane.f32.xlu0 %v193
  %v200 = vpop.xlane.xlu0 %199
  %201 = vadd.xlane.f32.xlu0 %v194
  %v202 = vpop.xlane.xlu0 %201
  %vm203 = vcmask 261120
  %v205 = vsel %vm203, %v179, 0
  %v208 = vsel %vm203, %v180, 0
  %v211 = vsel %vm203, %v181, 0
  %v214 = vsel %vm203, %v182, 0
  %216 = vmatprep.subr.mxu0 0.0
  %217 = vmatpush1.msra.mxu0 %v184
  %218 = vmatprep.subr.mxu0 0.0
  %219 = vmatpush1.msra.mxu0 %v186
  %220 = vmatprep.subr.mxu0 0.0
  %221 = vmatpush1.msra.mxu0 %v188
  %222 = vmatprep.subr.mxu0 0.0
  %223 = vmatpush1.msra.mxu0 %v190
  %224 = vmatprep.subr.mxu0 0.0
  %225 = vmatpush1.msra.mxu0 0.0
  %226 = vmatprep.subr.mxu0 0.0
  %227 = vmatpush1.msra.mxu0 0.0
  %228 = vmatprep.subr.mxu0 0.0
  %229 = vmatpush1.msra.mxu0 0.0
  %230 = vmatprep.subr.mxu0 0.0
  %231 = vmatpush1.msra.mxu0 0.0
  %232 = vmatprep.subr.mxu0 0.0
  %233 = vmatpush1.msra.mxu0 0.0
  %234 = vmatprep.subr.mxu0 0.0
  %235 = vmatpush1.msra.mxu0 0.0
  %236 = vmatprep.subr.mxu0 0.0
  %237 = vmatpush1.msra.mxu0 0.0
  %238 = vmatprep.subr.mxu0 0.0
  %239 = vmatpush1.msra.mxu0 0.0
  %240 = vmatprep.subr.mxu0 0.0
  %241 = vmatpush1.msra.mxu0 0.0
  %242 = vmatprep.subr.mxu0 0.0
  %243 = vmatpush1.msra.mxu0 0.0
  %244 = vmatprep.subr.mxu0 0.0
  %245 = vmatpush1.msra.mxu0 0.0
  %246 = vmatprep.subr.mxu0 0.0
  %247 = vmatpush1.msra.mxu0 0.0
  %248 = vmatprep.subr.mxu0 0.0
  %249 = vmatpush1.msra.mxu0 0.0
  %250 = vmatprep.subr.mxu0 0.0
  %251 = vmatpush1.msra.mxu0 0.0
  %252 = vmatprep.subr.mxu0 0.0
  %253 = vmatpush1.msra.mxu0 0.0
  %254 = vmatprep.subr.mxu0 0.0
  %255 = vmatpush1.msra.mxu0 0.0
  %256 = vmatprep.subr.mxu0 0.0
  %257 = vmatpush1.msra.mxu0 0.0
  %258 = vmatprep.subr.mxu0 0.0
  %259 = vmatpush1.msra.mxu0 0.0
  %260 = vmatprep.subr.mxu0 0.0
  %261 = vmatpush1.msra.mxu0 0.0
  %262 = vmatprep.subr.mxu0 0.0
  %263 = vmatpush1.msra.mxu0 0.0
  %264 = vmatprep.subr.mxu0 0.0
  %265 = vmatpush1.msra.mxu0 0.0
  %266 = vmatprep.subr.mxu0 0.0
  %267 = vmatpush1.msra.mxu0 0.0
  %268 = vmatprep.subr.mxu0 0.0
  %269 = vmatpush1.msra.mxu0 0.0
  %270 = vmatprep.subr.mxu0 0.0
  %271 = vmatpush1.msra.mxu0 0.0
  %272 = vmatprep.subr.mxu0 0.0
  %273 = vmatpush1.msra.mxu0 0.0
  %274 = vmatprep.subr.mxu0 0.0
  %275 = vmatpush1.msra.mxu0 0.0
  %276 = vmatprep.subr.mxu0 0.0
  %277 = vmatpush1.msra.mxu0 0.0
  %278 = vmatprep.subr.mxu0 0.0
  %279 = vmatpush1.msra.mxu0 0.0
  %280 = vmatprep.mubr.f32.mxu0 0.0
  %281 = vmatmul.mubr.f32.gmra.mrb[0].mxu0 %v205
  %v282 = vpop.f32.mrb[0].mxu0
  %v283 = vadd.f32 0.0, %v282
  %v284 = vpop.f32.mrb[0].mxu0
  %285 = vmatprep.mubr.f32.mxu0 0.0
  %286 = vmatmul.mubr.f32.gmra.mrb[0].mxu0 %v208
  %v287 = vpop.f32.mrb[0].mxu0
  %v288 = vadd.f32 0.0, %v287
  %v289 = vpop.f32.mrb[0].mxu0
  %290 = vmatprep.mubr.f32.mxu0 0.0
  %291 = vmatmul.mubr.f32.gmra.mrb[0].mxu0 %v211
  %v292 = vpop.f32.mrb[0].mxu0
  %v293 = vadd.f32 0.0, %v292
  %v294 = vpop.f32.mrb[0].mxu0
  %295 = vmatprep.mubr.f32.mxu0 0.0
  %296 = vmatmul.mubr.f32.gmra.mrb[0].mxu0 %v214
  %v297 = vpop.f32.mrb[0].mxu0
  %v298 = vadd.f32 0.0, %v297
  %v299 = vpop.f32.mrb[0].mxu0
  %300 = vdwg.mxu0
  %v301 = vmul.f32 %v283, 0.001953125
  %v302 = vmul.f32 %v288, 0.001953125
  %v303 = vmul.f32 %v293, 0.001953125
  %v304 = vmul.f32 %v298, 0.001953125
  %305 = vmatprep.subr.mxu0 0.0
  %306 = vmatpush1.msra.mxu0 %v196
  %307 = vmatprep.subr.mxu0 0.0
  %308 = vmatpush1.msra.mxu0 %v198
  %309 = vmatprep.subr.mxu0 0.0
  %310 = vmatpush1.msra.mxu0 %v200
  %311 = vmatprep.subr.mxu0 0.0
  %312 = vmatpush1.msra.mxu0 %v202
  %313 = vmatprep.subr.mxu0 0.0
  %314 = vmatpush1.msra.mxu0 0.0
  %315 = vmatprep.subr.mxu0 0.0
  %316 = vmatpush1.msra.mxu0 0.0
  %317 = vmatprep.subr.mxu0 0.0
  %318 = vmatpush1.msra.mxu0 0.0
  %319 = vmatprep.subr.mxu0 0.0
  %320 = vmatpush1.msra.mxu0 0.0
  %321 = vmatprep.subr.mxu0 0.0
  %322 = vmatpush1.msra.mxu0 0.0
  %323 = vmatprep.subr.mxu0 0.0
  %324 = vmatpush1.msra.mxu0 0.0
  %325 = vmatprep.subr.mxu0 0.0
  %326 = vmatpush1.msra.mxu0 0.0
  %327 = vmatprep.subr.mxu0 0.0
  %328 = vmatpush1.msra.mxu0 0.0
  %329 = vmatprep.subr.mxu0 0.0
  %330 = vmatpush1.msra.mxu0 0.0
  %331 = vmatprep.subr.mxu0 0.0
  %332 = vmatpush1.msra.mxu0 0.0
  %333 = vmatprep.subr.mxu0 0.0
  %334 = vmatpush1.msra.mxu0 0.0
  %335 = vmatprep.subr.mxu0 0.0
  %336 = vmatpush1.msra.mxu0 0.0
  %337 = vmatprep.subr.mxu0 0.0
  %338 = vmatpush1.msra.mxu0 0.0
  %339 = vmatprep.subr.mxu0 0.0
  %340 = vmatpush1.msra.mxu0 0.0
  %341 = vmatprep.subr.mxu0 0.0
  %342 = vmatpush1.msra.mxu0 0.0
  %343 = vmatprep.subr.mxu0 0.0
  %344 = vmatpush1.msra.mxu0 0.0
  %345 = vmatprep.subr.mxu0 0.0
  %346 = vmatpush1.msra.mxu0 0.0
  %347 = vmatprep.subr.mxu0 0.0
  %348 = vmatpush1.msra.mxu0 0.0
  %349 = vmatprep.subr.mxu0 0.0
  %350 = vmatpush1.msra.mxu0 0.0
  %351 = vmatprep.subr.mxu0 0.0
  %352 = vmatpush1.msra.mxu0 0.0
  %353 = vmatprep.subr.mxu0 0.0
  %354 = vmatpush1.msra.mxu0 0.0
  %355 = vmatprep.subr.mxu0 0.0
  %356 = vmatpush1.msra.mxu0 0.0
  %357 = vmatprep.subr.mxu0 0.0
  %358 = vmatpush1.msra.mxu0 0.0
  %359 = vmatprep.subr.mxu0 0.0
  %360 = vmatpush1.msra.mxu0 0.0
  %361 = vmatprep.subr.mxu0 0.0
  %362 = vmatpush1.msra.mxu0 0.0
  %363 = vmatprep.subr.mxu0 0.0
  %364 = vmatpush1.msra.mxu0 0.0
  %365 = vmatprep.subr.mxu0 0.0
  %366 = vmatpush1.msra.mxu0 0.0
  %367 = vmatprep.subr.mxu0 0.0
  %368 = vmatpush1.msra.mxu0 0.0
  %369 = vmatprep.mubr.f32.mxu0 0.0
  %370 = vmatmul.mubr.f32.gmra.mrb[0].mxu0 %v205
  %v371 = vpop.f32.mrb[0].mxu0
  %v372 = vadd.f32 0.0, %v371
  %v373 = vpop.f32.mrb[0].mxu0
  %374 = vmatprep.mubr.f32.mxu0 0.0
  %375 = vmatmul.mubr.f32.gmra.mrb[0].mxu0 %v208
  %v376 = vpop.f32.mrb[0].mxu0
  %v377 = vadd.f32 0.0, %v376
  %v378 = vpop.f32.mrb[0].mxu0
  %379 = vmatprep.mubr.f32.mxu0 0.0
  %380 = vmatmul.mubr.f32.gmra.mrb[0].mxu0 %v211
  %v381 = vpop.f32.mrb[0].mxu0
  %v382 = vadd.f32 0.0, %v381
  %v383 = vpop.f32.mrb[0].mxu0
  %384 = vmatprep.mubr.f32.mxu0 0.0
  %385 = vmatmul.mubr.f32.gmra.mrb[0].mxu0 %v214
  %v386 = vpop.f32.mrb[0].mxu0
  %v387 = vadd.f32 0.0, %v386
  %v388 = vpop.f32.mrb[0].mxu0
  %389 = vdwg.mxu0
  %v390 = vmul.f32 %v372, 0.001953125
  %v391 = vmul.f32 %v377, 0.001953125
  %v392 = vmul.f32 %v382, 0.001953125
  %v393 = vmul.f32 %v387, 0.001953125
  %v394 = vmul.f32 %v301, %v301
  %v395 = vmul.f32 %v302, %v302
  %v396 = vmul.f32 %v303, %v303
  %v397 = vmul.f32 %v304, %v304
  %v398 = vsub.f32 %v390, %v394
  %v399 = vsub.f32 %v391, %v395
  %v400 = vsub.f32 %v392, %v396
  %v401 = vsub.f32 %v393, %v397
  %v402 = vadd.f32 %v398, 1e-05
  %v403 = vadd.f32 %v399, 1e-05
  %v404 = vadd.f32 %v400, 1e-05
  %v405 = vadd.f32 %v401, 1e-05
  %v406 = vrsqrt.pop %v402
  %v407 = vrsqrt.pop %v403
  %v408 = vrsqrt.pop %v404
  %v409 = vrsqrt.pop %v405
  %v410 = vmul.f32 %v171, %v406
  %v411 = vmul.f32 %v172, %v407
  %v412 = vmul.f32 %v173, %v408
  %v413 = vmul.f32 %v174, %v409
  %v414 = vmul.f32 %v301, %v410
  %v415 = vmul.f32 %v302, %v411
  %v416 = vmul.f32 %v303, %v412
  %v417 = vmul.f32 %v304, %v413
  %v418 = vsub.f32 %v175, %v414
  %v419 = vsub.f32 %v176, %v415
  %v420 = vsub.f32 %v177, %v416
  %v421 = vsub.f32 %v178, %v417
  %423 = vset.pattern.permute.xlu0 0
  %424 = vperm.xlu0 %423, %v410
  %v425 = vpop.permute.xlu0 %424
  %428 = vset.pattern.permute.xlu0 0
  %429 = vperm.xlu0 %428, %v411
  %v430 = vpop.permute.xlu0 %429
  %433 = vset.pattern.permute.xlu0 0
  %434 = vperm.xlu0 %433, %v412
  %v435 = vpop.permute.xlu0 %434
  %438 = vset.pattern.permute.xlu0 0
  %439 = vperm.xlu0 %438, %v413
  %v440 = vpop.permute.xlu0 %439
  %v442 = vmul.f32 %v157, %v425
  %v443 = vmul.f32 %v160, %v430
  %v444 = vmul.f32 %v165, %v435
  %v445 = vmul.f32 %v168, %v440
  %447 = vset.pattern.permute.xlu0 0
  %448 = vperm.xlu0 %447, %v418
  %v449 = vpop.permute.xlu0 %448
  %452 = vset.pattern.permute.xlu0 0
  %453 = vperm.xlu0 %452, %v419
  %v454 = vpop.permute.xlu0 %453
  %457 = vset.pattern.permute.xlu0 0
  %458 = vperm.xlu0 %457, %v420
  %v459 = vpop.permute.xlu0 %458
  %462 = vset.pattern.permute.xlu0 0
  %463 = vperm.xlu0 %462, %v421
  %v464 = vpop.permute.xlu0 %463
  %v466 = vadd.f32 %v442, %v449
  %v467 = vadd.f32 %v443, %v454
  %v468 = vadd.f32 %v444, %v459
  %v469 = vadd.f32 %v445, %v464
  %v470 = vmax.f32 %v466, 0.0
  %v471 = vmax.f32 %v467, 0.0
  %v472 = vmax.f32 %v468, 0.0
  %v473 = vmax.f32 %v469, 0.0
  %v474 = vpack.c.bf16 %v471, %v470
  %v475 = vpack.c.bf16 %v473, %v472
  %v478 = vunpack.c.l.b16 %v474
  %v479 = vunpack.c.h.b16 %v474
  %v480 = vunpack.c.l.b16 %v475
  %v481 = vunpack.c.h.b16 %v475
  %v482 = vpack.c.b16 %v478, %v478
  %v483 = vpack.c.b16 %v479, %v479
  %v484 = vpack.c.b16 %v480, %v480
  %v485 = vpack.c.b16 %v481, %v481
  %490 = vst [vmem:[%s5] sm:$0xf] %v482
  %491 = vst [vmem:[%s5 + $0x4] sm:$0xf] %v483
  %492 = vst [vmem:[%s5 + $0x8] sm:$0xf] %v484
  %493 = vst [vmem:[%s5 + $0xc] sm:$0xf] %v485
  // Predicated region
  $region22: #{multi_modal_block.4} parent=0 // pred_check
    _
  $region23: #{multi_modal_block.4} parent=0 // pred_check_branch
    %495 = sbr.rel (0) target = $region25
  $region24: #{multi_modal_block.4} parent=0 // pred_region
    _
  $region25: #{multi_modal_block.4} parent=0 // pred_fallthru
    _
  // Predicated region
  $region26: #{multi_modal_block.4} parent=0 // pred_check
    _
  $region27: #{multi_modal_block.4} parent=0 // pred_check_branch
    %497 = sbr.rel (0) target = $region29
  $region28: #{multi_modal_block.4} parent=0 // pred_region
    _
  $region29: #{multi_modal_block.4} parent=0 // pred_fallthru
    _

// kernel: multi_modal_block.5
$region0: #{multi_modal_block.5}
  #allocation0 [shape = 'u32[]', space=smem, size = 0x4, offset = 0x4, fixed_abs, tag = 'smem constant byte address 0x4 - core index']
  #allocation1 [shape = 'u32[144,128]{1,0:T(1,128)}', space=vmem, size = 0x12000, scoped, tag = 'internal scratch']
  %s0 = inlined_call_operand.vmem [shape: bf16[72,512], index: 0, kind: input, shape index: {}]
  %s1 = inlined_call_operand.vmem [shape: bf16[16,72], index: 1, kind: input, shape index: {}]
  %s2 = inlined_call_operand.vmem [shape: f32[16,1], index: 2, kind: input, shape index: {}]
  %s3 = inlined_call_operand.vmem [shape: f32[16,1], index: 3, kind: input, shape index: {}]
  %s4 = inlined_call_operand.vmem [shape: f32[16,16], index: 4, kind: input, shape index: {}]
  %s5 = inlined_call_operand.vmem [shape: bf16[32,512], index: 5, kind: input, shape index: {}]
  %s6 = inlined_call_operand.vmem [shape: bf16[32,32], index: 6, kind: input, shape index: {}]
  %s7 = inlined_call_operand.vmem [shape: bf16[32,16], index: 7, kind: input, shape index: {}]
  %s8 = inlined_call_operand.vmem [shape: f32[32,1], index: 8, kind: input, shape index: {}]
  %s9 = inlined_call_operand.vmem [shape: f32[32,1], index: 9, kind: input, shape index: {}]
  %s10 = inlined_call_operand.vmem [shape: f32[32,32], index: 10, kind: input, shape index: {}]
  %s11 = inlined_call_operand.vmem [shape: f32[32,512], index: 11, kind: output, shape index: {}]
  %s12 = sld [smem:[#allocation0]]
  $region54: #{multi_modal_block.5} parent=0
    _
  %s14 = ssub.s32 1, %s12
  %s15 = scalar_select 0, %s14, %s12
  // Predicated region
  $region2: #{multi_modal_block.5} parent=0 // pred_check
    _
  $region3: #{multi_modal_block.5} parent=0 // pred_check_branch
    %17 = sbr.rel (0) target = $region5
  $region4: #{multi_modal_block.5} parent=0 // pred_region
    _
  $region5: #{multi_modal_block.5} parent=0 // pred_fallthru
    _
  // Predicated region
  $region6: #{multi_modal_block.5} parent=0 // pred_check
    _
  $region7: #{multi_modal_block.5} parent=0 // pred_check_branch
    %19 = sbr.rel (0) target = $region9
  $region8: #{multi_modal_block.5} parent=0 // pred_region
    _
  $region9: #{multi_modal_block.5} parent=0 // pred_fallthru
    _
  // Predicated region
  $region10: #{multi_modal_block.5} parent=0 // pred_check
    _
  $region11: #{multi_modal_block.5} parent=0 // pred_check_branch
    %21 = sbr.rel (0) target = $region13
  $region12: #{multi_modal_block.5} parent=0 // pred_region
    _
  $region13: #{multi_modal_block.5} parent=0 // pred_fallthru
    _
  // Predicated region
  $region14: #{multi_modal_block.5} parent=0 // pred_check
    _
  $region15: #{multi_modal_block.5} parent=0 // pred_check_branch
    %23 = sbr.rel (0) target = $region17
  $region16: #{multi_modal_block.5} parent=0 // pred_region
    _
  $region17: #{multi_modal_block.5} parent=0 // pred_fallthru
    _
  // Predicated region
  $region18: #{multi_modal_block.5} parent=0 // pred_check
    _
  $region19: #{multi_modal_block.5} parent=0 // pred_check_branch
    %25 = sbr.rel (0) target = $region21
  $region20: #{multi_modal_block.5} parent=0 // pred_region
    _
  $region21: #{multi_modal_block.5} parent=0 // pred_fallthru
    _
  // Predicated region
  $region22: #{multi_modal_block.5} parent=0 // pred_check
    _
  $region23: #{multi_modal_block.5} parent=0 // pred_check_branch
    %27 = sbr.rel (0) target = $region25
  $region24: #{multi_modal_block.5} parent=0 // pred_region
    _
  $region25: #{multi_modal_block.5} parent=0 // pred_fallthru
    _
  // Predicated region
  $region26: #{multi_modal_block.5} parent=0 // pred_check
    _
  $region27: #{multi_modal_block.5} parent=0 // pred_check_branch
    %29 = sbr.rel (0) target = $region29
  $region28: #{multi_modal_block.5} parent=0 // pred_region
    _
  $region29: #{multi_modal_block.5} parent=0 // pred_fallthru
    _
  // Predicated region
  $region30: #{multi_modal_block.5} parent=0 // pred_check
    _
  $region31: #{multi_modal_block.5} parent=0 // pred_check_branch
    %31 = sbr.rel (0) target = $region33
  $region32: #{multi_modal_block.5} parent=0 // pred_region
    _
  $region33: #{multi_modal_block.5} parent=0 // pred_fallthru
    _
  // Predicated region
  $region34: #{multi_modal_block.5} parent=0 // pred_check
    _
  $region35: #{multi_modal_block.5} parent=0 // pred_check_branch
    %33 = sbr.rel (0) target = $region37
  $region36: #{multi_modal_block.5} parent=0 // pred_region
    _
  $region37: #{multi_modal_block.5} parent=0 // pred_fallthru
    _
  // Predicated region
  $region38: #{multi_modal_block.5} parent=0 // pred_check
    _
  $region39: #{multi_modal_block.5} parent=0 // pred_check_branch
    %35 = sbr.rel (0) target = $region41
  $region40: #{multi_modal_block.5} parent=0 // pred_region
    _
  $region41: #{multi_modal_block.5} parent=0 // pred_fallthru
    _
  // Predicated region
  $region42: #{multi_modal_block.5} parent=0 // pred_check
    _
  $region43: #{multi_modal_block.5} parent=0 // pred_check_branch
    %37 = sbr.rel (0) target = $region45
  $region44: #{multi_modal_block.5} parent=0 // pred_region
    _
  $region45: #{multi_modal_block.5} parent=0 // pred_fallthru
    _
  %v39 = vld [vmem:[%s1] sm:$0xf]
  %v40 = vld [vmem:[%s1 + $0x4] sm:$0xf]
  %v41 = vld [vmem:[%s0] sm:$0xff]
  %v42 = vld [vmem:[%s0 + $0x8] sm:$0xff]
  %v43 = vld [vmem:[%s0 + $0x10] sm:$0xff]
  %v44 = vld [vmem:[%s0 + $0x18] sm:$0xff]
  %v45 = vld [vmem:[%s0 + $0x20] sm:$0xff]
  %v46 = vld [vmem:[%s0 + $0x28] sm:$0xff]
  %v47 = vld [vmem:[%s0 + $0x30] sm:$0xff]
  %v48 = vld [vmem:[%s0 + $0x38] sm:$0xff]
  %v49 = vld [vmem:[%s0 + $0x40] sm:$0xff]
  %v50 = vld [vmem:[%s0 + $0x48] sm:$0xff]
  %v51 = vld [vmem:[%s0 + $0x50] sm:$0xff]
  %v52 = vld [vmem:[%s0 + $0x58] sm:$0xff]
  %v53 = vld [vmem:[%s0 + $0x60] sm:$0xff]
  %v54 = vld [vmem:[%s0 + $0x68] sm:$0xff]
  %v55 = vld [vmem:[%s0 + $0x70] sm:$0xff]
  %v56 = vld [vmem:[%s0 + $0x78] sm:$0xff]
  %v57 = vld [vmem:[%s0 + $0x80] sm:$0xff]
  %v58 = vld [vmem:[%s0 + $0x88] sm:$0xff]
  %v61 = vunpack.c.l.b16 %v39
  %v62 = vunpack.c.l.b16 %v40
  %v63 = vpack.c.b16 %v62, %v61
  %v82 = vunpack.c.l.b16 %v41
  %v83 = vunpack.c.h.b16 %v41
  %v84 = vunpack.c.l.b16 %v42
  %v85 = vunpack.c.h.b16 %v42
  %v86 = vunpack.c.l.b16 %v43
  %v87 = vunpack.c.h.b16 %v43
  %v88 = vunpack.c.l.b16 %v44
  %v89 = vunpack.c.h.b16 %v44
  %v90 = vunpack.c.l.b16 %v45
  %v91 = vunpack.c.h.b16 %v45
  %v92 = vunpack.c.l.b16 %v46
  %v93 = vunpack.c.h.b16 %v46
  %v94 = vunpack.c.l.b16 %v47
  %v95 = vunpack.c.h.b16 %v47
  %v96 = vunpack.c.l.b16 %v48
  %v97 = vunpack.c.h.b16 %v48
  %v98 = vunpack.c.l.b16 %v49
  %v99 = vunpack.c.h.b16 %v49
  %v100 = vunpack.c.l.b16 %v50
  %v101 = vunpack.c.h.b16 %v50
  %v102 = vunpack.c.l.b16 %v51
  %v103 = vunpack.c.h.b16 %v51
  %v104 = vunpack.c.l.b16 %v52
  %v105 = vunpack.c.h.b16 %v52
  %v106 = vunpack.c.l.b16 %v53
  %v107 = vunpack.c.h.b16 %v53
  %v108 = vunpack.c.l.b16 %v54
  %v109 = vunpack.c.h.b16 %v54
  %v110 = vunpack.c.l.b16 %v55
  %v111 = vunpack.c.h.b16 %v55
  %v112 = vunpack.c.l.b16 %v56
  %v113 = vunpack.c.h.b16 %v56
  %v114 = vunpack.c.l.b16 %v57
  %v115 = vunpack.c.h.b16 %v57
  %v116 = vunpack.c.l.b16 %v58
  %v117 = vunpack.c.h.b16 %v58
  %v118 = vpack.c.b16 %v86, %v82
  %v119 = vpack.c.b16 %v87, %v83
  %v120 = vpack.c.b16 %v88, %v84
  %v121 = vpack.c.b16 %v89, %v85
  %v122 = vpack.c.b16 %v94, %v90
  %v123 = vpack.c.b16 %v95, %v91
  %v124 = vpack.c.b16 %v96, %v92
  %v125 = vpack.c.b16 %v97, %v93
  %v126 = vpack.c.b16 %v102, %v98
  %v127 = vpack.c.b16 %v103, %v99
  %v128 = vpack.c.b16 %v104, %v100
  %v129 = vpack.c.b16 %v105, %v101
  %v130 = vpack.c.b16 %v110, %v106
  %v131 = vpack.c.b16 %v111, %v107
  %v132 = vpack.c.b16 %v112, %v108
  %v133 = vpack.c.b16 %v113, %v109
  %v134 = vpack.c.b16 %v114, %v114
  %v135 = vpack.c.b16 %v115, %v115
  %v136 = vpack.c.b16 %v116, %v116
  %v137 = vpack.c.b16 %v117, %v117
  %vm154 = vcmask 588800
  %v156 = vsel %vm154, %v63, 0
  %vm158 = vcmask 1043456
  %v160 = vsel %vm158, %v134, 0
  %v163 = vsel %vm158, %v135, 0
  %v166 = vsel %vm158, %v136, 0
  %v169 = vsel %vm158, %v137, 0
  %171 = vmatprep.subr.bf16.mxu0 %v119
  %172 = vmatpush1.bf16.msra.mxu0 %v118
  %173 = vmatprep.subr.bf16.mxu0 %v123
  %174 = vmatpush1.bf16.msra.mxu0 %v122
  %175 = vmatprep.subr.bf16.mxu0 %v127
  %176 = vmatpush1.bf16.msra.mxu0 %v126
  %177 = vmatprep.subr.bf16.mxu0 %v131
  %178 = vmatpush1.bf16.msra.mxu0 %v130
  %179 = vmatprep.subr.bf16.mxu0 %v163
  %180 = vmatpush1.bf16.msra.mxu0 %v160
  %181 = vmatprep.subr.bf16.mxu0 0
  %182 = vmatpush1.bf16.msra.mxu0 0
  %183 = vmatprep.subr.bf16.mxu0 0
  %184 = vmatpush1.bf16.msra.mxu0 0
  %185 = vmatprep.subr.bf16.mxu0 0
  %186 = vmatpush1.bf16.msra.mxu0 0
  %187 = vmatprep.subr.bf16.mxu0 0
  %188 = vmatpush1.bf16.msra.mxu0 0
  %189 = vmatprep.subr.bf16.mxu0 0
  %190 = vmatpush1.bf16.msra.mxu0 0
  %191 = vmatprep.subr.bf16.mxu0 0
  %192 = vmatpush1.bf16.msra.mxu0 0
  %193 = vmatprep.subr.bf16.mxu0 0
  %194 = vmatpush1.bf16.msra.mxu0 0
  %195 = vmatprep.subr.bf16.mxu0 0
  %196 = vmatpush1.bf16.msra.mxu0 0
  %197 = vmatprep.subr.bf16.mxu0 0
  %198 = vmatpush1.bf16.msra.mxu0 0
  %199 = vmatprep.subr.bf16.mxu0 0
  %200 = vmatpush1.bf16.msra.mxu0 0
  %201 = vmatprep.subr.bf16.mxu0 0
  %202 = vmatpush1.bf16.msra.mxu0 0
  %203 = vmatprep.mubr.bf16.mxu0 0
  %204 = vmatmul.mubr.bf16.gmra.mrb[0].mxu0 %v156
  %v205 = vpop.f32.mrb[0].mxu0
  %v206 = vadd.f32 0.0, %v205
  %v207 = vpop.f32.mrb[0].mxu0
  %v208 = vadd.f32 0.0, %v207
  %v209 = vpop.f32.mrb[0].mxu0
  %v210 = vadd.f32 0.0, %v209
  %v211 = vpop.f32.mrb[0].mxu0
  %v212 = vadd.f32 0.0, %v211
  %213 = vdwg.mxu0
  %214 = vmatprep.subr.bf16.mxu0 %v121
  %215 = vmatpush1.bf16.msra.mxu0 %v120
  %216 = vmatprep.subr.bf16.mxu0 %v125
  %217 = vmatpush1.bf16.msra.mxu0 %v124
  %218 = vmatprep.subr.bf16.mxu0 %v129
  %219 = vmatpush1.bf16.msra.mxu0 %v128
  %220 = vmatprep.subr.bf16.mxu0 %v133
  %221 = vmatpush1.bf16.msra.mxu0 %v132
  %222 = vmatprep.subr.bf16.mxu0 %v169
  %223 = vmatpush1.bf16.msra.mxu0 %v166
  %224 = vmatprep.subr.bf16.mxu0 0
  %225 = vmatpush1.bf16.msra.mxu0 0
  %226 = vmatprep.subr.bf16.mxu0 0
  %227 = vmatpush1.bf16.msra.mxu0 0
  %228 = vmatprep.subr.bf16.mxu0 0
  %229 = vmatpush1.bf16.msra.mxu0 0
  %230 = vmatprep.subr.bf16.mxu0 0
  %231 = vmatpush1.bf16.msra.mxu0 0
  %232 = vmatprep.subr.bf16.mxu0 0
  %233 = vmatpush1.bf16.msra.mxu0 0
  %234 = vmatprep.subr.bf16.mxu0 0
  %235 = vmatpush1.bf16.msra.mxu0 0
  %236 = vmatprep.subr.bf16.mxu0 0
  %237 = vmatpush1.bf16.msra.mxu0 0
  %238 = vmatprep.subr.bf16.mxu0 0
  %239 = vmatpush1.bf16.msra.mxu0 0
  %240 = vmatprep.subr.bf16.mxu0 0
  %241 = vmatpush1.bf16.msra.mxu0 0
  %242 = vmatprep.subr.bf16.mxu0 0
  %243 = vmatpush1.bf16.msra.mxu0 0
  %244 = vmatprep.subr.bf16.mxu0 0
  %245 = vmatpush1.bf16.msra.mxu0 0
  %246 = vmatprep.mubr.bf16.mxu0 0
  %247 = vmatmul.mubr.bf16.gmra.mrb[0].mxu0 %v156
  %v248 = vpop.f32.mrb[0].mxu0
  %v249 = vadd.f32 0.0, %v248
  %v250 = vpop.f32.mrb[0].mxu0
  %v251 = vadd.f32 0.0, %v250
  %v252 = vpop.f32.mrb[0].mxu0
  %v253 = vadd.f32 0.0, %v252
  %v254 = vpop.f32.mrb[0].mxu0
  %v255 = vadd.f32 0.0, %v254
  %256 = vdwg.mxu0
  %v257 = vld [vmem:[%s2] sm:$0xff]
  %v258 = vld [vmem:[%s2 + $0x8] sm:$0xff]
  %v259 = vld [vmem:[%s3] sm:$0xff]
  %v260 = vld [vmem:[%s3 + $0x8] sm:$0xff]
  %v261 = vld [vmem:[%s4] sm:$0xff]
  %v262 = vld [vmem:[%s4 + $0x8] sm:$0xff]
  %v263 = vadd.f32 %v206, %v208
  %v264 = vadd.f32 %v263, %v249
  %v265 = vadd.f32 %v264, %v251
  %266 = vadd.xlane.f32.xlu0 %v265
  %v267 = vpop.xlane.xlu0 %266
  %v268 = vadd.f32 %v210, %v212
  %v269 = vadd.f32 %v268, %v253
  %v270 = vadd.f32 %v269, %v255
  %271 = vadd.xlane.f32.xlu0 %v270
  %v272 = vpop.xlane.xlu0 %271
  %v273 = vmul.f32 %v206, %v206
  %v274 = vmul.f32 %v208, %v208
  %v275 = vmul.f32 %v249, %v249
  %v276 = vmul.f32 %v251, %v251
  %v277 = vmul.f32 %v210, %v210
  %v278 = vmul.f32 %v212, %v212
  %v279 = vmul.f32 %v253, %v253
  %v280 = vmul.f32 %v255, %v255
  %v281 = vadd.f32 %v273, %v274
  %v282 = vadd.f32 %v281, %v275
  %v283 = vadd.f32 %v282, %v276
  %284 = vadd.xlane.f32.xlu0 %v283
  %v285 = vpop.xlane.xlu0 %284
  %v286 = vadd.f32 %v277, %v278
  %v287 = vadd.f32 %v286, %v279
  %v288 = vadd.f32 %v287, %v280
  %289 = vadd.xlane.f32.xlu0 %v288
  %v290 = vpop.xlane.xlu0 %289
  %vm291 = vcmask 130048
  %v293 = vsel %vm291, %v261, 0
  %v296 = vsel %vm291, %v262, 0
  %298 = vmatprep.subr.mxu0 0.0
  %299 = vmatpush1.msra.mxu0 %v267
  %300 = vmatprep.subr.mxu0 0.0
  %301 = vmatpush1.msra.mxu0 %v272
  %302 = vmatprep.subr.mxu0 0.0
  %303 = vmatpush1.msra.mxu0 0.0
  %304 = vmatprep.subr.mxu0 0.0
  %305 = vmatpush1.msra.mxu0 0.0
  %306 = vmatprep.subr.mxu0 0.0
  %307 = vmatpush1.msra.mxu0 0.0
  %308 = vmatprep.subr.mxu0 0.0
  %309 = vmatpush1.msra.mxu0 0.0
  %310 = vmatprep.subr.mxu0 0.0
  %311 = vmatpush1.msra.mxu0 0.0
  %312 = vmatprep.subr.mxu0 0.0
  %313 = vmatpush1.msra.mxu0 0.0
  %314 = vmatprep.subr.mxu0 0.0
  %315 = vmatpush1.msra.mxu0 0.0
  %316 = vmatprep.subr.mxu0 0.0
  %317 = vmatpush1.msra.mxu0 0.0
  %318 = vmatprep.subr.mxu0 0.0
  %319 = vmatpush1.msra.mxu0 0.0
  %320 = vmatprep.subr.mxu0 0.0
  %321 = vmatpush1.msra.mxu0 0.0
  %322 = vmatprep.subr.mxu0 0.0
  %323 = vmatpush1.msra.mxu0 0.0
  %324 = vmatprep.subr.mxu0 0.0
  %325 = vmatpush1.msra.mxu0 0.0
  %326 = vmatprep.subr.mxu0 0.0
  %327 = vmatpush1.msra.mxu0 0.0
  %328 = vmatprep.subr.mxu0 0.0
  %329 = vmatpush1.msra.mxu0 0.0
  %330 = vmatprep.subr.mxu0 0.0
  %331 = vmatpush1.msra.mxu0 0.0
  %332 = vmatprep.subr.mxu0 0.0
  %333 = vmatpush1.msra.mxu0 0.0
  %334 = vmatprep.subr.mxu0 0.0
  %335 = vmatpush1.msra.mxu0 0.0
  %336 = vmatprep.subr.mxu0 0.0
  %337 = vmatpush1.msra.mxu0 0.0
  %338 = vmatprep.subr.mxu0 0.0
  %339 = vmatpush1.msra.mxu0 0.0
  %340 = vmatprep.subr.mxu0 0.0
  %341 = vmatpush1.msra.mxu0 0.0
  %342 = vmatprep.subr.mxu0 0.0
  %343 = vmatpush1.msra.mxu0 0.0
  %344 = vmatprep.subr.mxu0 0.0
  %345 = vmatpush1.msra.mxu0 0.0
  %346 = vmatprep.subr.mxu0 0.0
  %347 = vmatpush1.msra.mxu0 0.0
  %348 = vmatprep.subr.mxu0 0.0
  %349 = vmatpush1.msra.mxu0 0.0
  %350 = vmatprep.subr.mxu0 0.0
  %351 = vmatpush1.msra.mxu0 0.0
  %352 = vmatprep.subr.mxu0 0.0
  %353 = vmatpush1.msra.mxu0 0.0
  %354 = vmatprep.subr.mxu0 0.0
  %355 = vmatpush1.msra.mxu0 0.0
  %356 = vmatprep.subr.mxu0 0.0
  %357 = vmatpush1.msra.mxu0 0.0
  %358 = vmatprep.subr.mxu0 0.0
  %359 = vmatpush1.msra.mxu0 0.0
  %360 = vmatprep.subr.mxu0 0.0
  %361 = vmatpush1.msra.mxu0 0.0
  %362 = vmatprep.mubr.f32.mxu0 0.0
  %363 = vmatmul.mubr.f32.gmra.mrb[0].mxu0 %v293
  %v364 = vpop.f32.mrb[0].mxu0
  %v365 = vadd.f32 0.0, %v364
  %v366 = vpop.f32.mrb[0].mxu0
  %367 = vmatprep.mubr.f32.mxu0 0.0
  %368 = vmatmul.mubr.f32.gmra.mrb[0].mxu0 %v296
  %v369 = vpop.f32.mrb[0].mxu0
  %v370 = vadd.f32 0.0, %v369
  %v371 = vpop.f32.mrb[0].mxu0
  %372 = vdwg.mxu0
  %v373 = vmul.f32 %v365, 0.00048828125
  %v374 = vmul.f32 %v370, 0.00048828125
  %375 = vmatprep.subr.mxu0 0.0
  %376 = vmatpush1.msra.mxu0 %v285
  %377 = vmatprep.subr.mxu0 0.0
  %378 = vmatpush1.msra.mxu0 %v290
  %379 = vmatprep.subr.mxu0 0.0
  %380 = vmatpush1.msra.mxu0 0.0
  %381 = vmatprep.subr.mxu0 0.0
  %382 = vmatpush1.msra.mxu0 0.0
  %383 = vmatprep.subr.mxu0 0.0
  %384 = vmatpush1.msra.mxu0 0.0
  %385 = vmatprep.subr.mxu0 0.0
  %386 = vmatpush1.msra.mxu0 0.0
  %387 = vmatprep.subr.mxu0 0.0
  %388 = vmatpush1.msra.mxu0 0.0
  %389 = vmatprep.subr.mxu0 0.0
  %390 = vmatpush1.msra.mxu0 0.0
  %391 = vmatprep.subr.mxu0 0.0
  %392 = vmatpush1.msra.mxu0 0.0
  %393 = vmatprep.subr.mxu0 0.0
  %394 = vmatpush1.msra.mxu0 0.0
  %395 = vmatprep.subr.mxu0 0.0
  %396 = vmatpush1.msra.mxu0 0.0
  %397 = vmatprep.subr.mxu0 0.0
  %398 = vmatpush1.msra.mxu0 0.0
  %399 = vmatprep.subr.mxu0 0.0
  %400 = vmatpush1.msra.mxu0 0.0
  %401 = vmatprep.subr.mxu0 0.0
  %402 = vmatpush1.msra.mxu0 0.0
  %403 = vmatprep.subr.mxu0 0.0
  %404 = vmatpush1.msra.mxu0 0.0
  %405 = vmatprep.subr.mxu0 0.0
  %406 = vmatpush1.msra.mxu0 0.0
  %407 = vmatprep.subr.mxu0 0.0
  %408 = vmatpush1.msra.mxu0 0.0
  %409 = vmatprep.subr.mxu0 0.0
  %410 = vmatpush1.msra.mxu0 0.0
  %411 = vmatprep.subr.mxu0 0.0
  %412 = vmatpush1.msra.mxu0 0.0
  %413 = vmatprep.subr.mxu0 0.0
  %414 = vmatpush1.msra.mxu0 0.0
  %415 = vmatprep.subr.mxu0 0.0
  %416 = vmatpush1.msra.mxu0 0.0
  %417 = vmatprep.subr.mxu0 0.0
  %418 = vmatpush1.msra.mxu0 0.0
  %419 = vmatprep.subr.mxu0 0.0
  %420 = vmatpush1.msra.mxu0 0.0
  %421 = vmatprep.subr.mxu0 0.0
  %422 = vmatpush1.msra.mxu0 0.0
  %423 = vmatprep.subr.mxu0 0.0
  %424 = vmatpush1.msra.mxu0 0.0
  %425 = vmatprep.subr.mxu0 0.0
  %426 = vmatpush1.msra.mxu0 0.0
  %427 = vmatprep.subr.mxu0 0.0
  %428 = vmatpush1.msra.mxu0 0.0
  %429 = vmatprep.subr.mxu0 0.0
  %430 = vmatpush1.msra.mxu0 0.0
  %431 = vmatprep.subr.mxu0 0.0
  %432 = vmatpush1.msra.mxu0 0.0
  %433 = vmatprep.subr.mxu0 0.0
  %434 = vmatpush1.msra.mxu0 0.0
  %435 = vmatprep.subr.mxu0 0.0
  %436 = vmatpush1.msra.mxu0 0.0
  %437 = vmatprep.subr.mxu0 0.0
  %438 = vmatpush1.msra.mxu0 0.0
  %439 = vmatprep.mubr.f32.mxu0 0.0
  %440 = vmatmul.mubr.f32.gmra.mrb[0].mxu0 %v293
  %v441 = vpop.f32.mrb[0].mxu0
  %v442 = vadd.f32 0.0, %v441
  %v443 = vpop.f32.mrb[0].mxu0
  %444 = vmatprep.mubr.f32.mxu0 0.0
  %445 = vmatmul.mubr.f32.gmra.mrb[0].mxu0 %v296
  %v446 = vpop.f32.mrb[0].mxu0
  %v447 = vadd.f32 0.0, %v446
  %v448 = vpop.f32.mrb[0].mxu0
  %449 = vdwg.mxu0
  %v450 = vmul.f32 %v442, 0.00048828125
  %v451 = vmul.f32 %v447, 0.00048828125
  %v452 = vmul.f32 %v373, %v373
  %v453 = vmul.f32 %v374, %v374
  %v454 = vsub.f32 %v450, %v452
  %v455 = vsub.f32 %v451, %v453
  %v456 = vadd.f32 %v454, 1e-05
  %v457 = vadd.f32 %v455, 1e-05
  %v458 = vrsqrt.pop %v456
  %v459 = vrsqrt.pop %v457
  %v460 = vmul.f32 %v257, %v458
  %v461 = vmul.f32 %v258, %v459
  %v462 = vmul.f32 %v373, %v460
  %v463 = vmul.f32 %v374, %v461
  %v464 = vsub.f32 %v259, %v462
  %v465 = vsub.f32 %v260, %v463
  %467 = vset.pattern.permute.xlu0 0
  %468 = vperm.xlu0 %467, %v460
  %v469 = vpop.permute.xlu0 %468
  %472 = vset.pattern.permute.xlu0 0
  %473 = vperm.xlu0 %472, %v461
  %v474 = vpop.permute.xlu0 %473
  %v476 = vmul.f32 %v206, %v469
  %v477 = vmul.f32 %v208, %v469
  %v478 = vmul.f32 %v249, %v469
  %v479 = vmul.f32 %v251, %v469
  %v480 = vmul.f32 %v210, %v474
  %v481 = vmul.f32 %v212, %v474
  %v482 = vmul.f32 %v253, %v474
  %v483 = vmul.f32 %v255, %v474
  %485 = vset.pattern.permute.xlu0 0
  %486 = vperm.xlu0 %485, %v464
  %v487 = vpop.permute.xlu0 %486
  %490 = vset.pattern.permute.xlu0 0
  %491 = vperm.xlu0 %490, %v465
  %v492 = vpop.permute.xlu0 %491
  %v494 = vadd.f32 %v476, %v487
  %v495 = vadd.f32 %v477, %v487
  %v496 = vadd.f32 %v478, %v487
  %v497 = vadd.f32 %v479, %v487
  %v498 = vadd.f32 %v480, %v492
  %v499 = vadd.f32 %v481, %v492
  %v500 = vadd.f32 %v482, %v492
  %v501 = vadd.f32 %v483, %v492
  %v502 = vmax.f32 %v494, 0.0
  %v503 = vmax.f32 %v495, 0.0
  %v504 = vmax.f32 %v496, 0.0
  %v505 = vmax.f32 %v497, 0.0
  %v506 = vmax.f32 %v498, 0.0
  %v507 = vmax.f32 %v499, 0.0
  %v508 = vmax.f32 %v500, 0.0
  %v509 = vmax.f32 %v501, 0.0
  %v510 = vld [vmem:[%s6] sm:$0xf]
  %v511 = vld [vmem:[%s6 + $0x4] sm:$0xf]
  %v512 = vld [vmem:[%s6 + $0x8] sm:$0xf]
  %v513 = vld [vmem:[%s6 + $0xc] sm:$0xf]
  %v514 = vld [vmem:[%s5] sm:$0xff]
  %v515 = vld [vmem:[%s5 + $0x8] sm:$0xff]
  %v516 = vld [vmem:[%s5 + $0x10] sm:$0xff]
  %v517 = vld [vmem:[%s5 + $0x18] sm:$0xff]
  %v518 = vld [vmem:[%s5 + $0x20] sm:$0xff]
  %v519 = vld [vmem:[%s5 + $0x28] sm:$0xff]
  %v520 = vld [vmem:[%s5 + $0x30] sm:$0xff]
  %v521 = vld [vmem:[%s5 + $0x38] sm:$0xff]
  %v522 = vld [vmem:[%s7] sm:$0xf]
  %v523 = vld [vmem:[%s7 + $0x4] sm:$0xf]
  %v524 = vld [vmem:[%s7 + $0x8] sm:$0xf]
  %v525 = vld [vmem:[%s7 + $0xc] sm:$0xf]
  %v526 = vpack.c.bf16 %v506, %v502
  %v527 = vpack.c.bf16 %v507, %v503
  %v528 = vpack.c.bf16 %v508, %v504
  %v529 = vpack.c.bf16 %v509, %v505
  %v534 = vunpack.c.l.b16 %v522
  %v535 = vunpack.c.l.b16 %v523
  %v536 = vunpack.c.l.b16 %v524
  %v537 = vunpack.c.l.b16 %v525
  %v538 = vpack.c.b16 %v535, %v534
  %v539 = vpack.c.b16 %v537, %v536
  %v541 = vsel %vm291, %v538, 0
  %v544 = vsel %vm291, %v539, 0
  %546 = vmatprep.subr.bf16.mxu0 %v527
  %547 = vmatpush1.bf16.msra.mxu0 %v526
  %548 = vmatprep.subr.bf16.mxu0 0
  %549 = vmatpush1.bf16.msra.mxu0 0
  %550 = vmatprep.subr.bf16.mxu0 0
  %551 = vmatpush1.bf16.msra.mxu0 0
  %552 = vmatprep.subr.bf16.mxu0 0
  %553 = vmatpush1.bf16.msra.mxu0 0
  %554 = vmatprep.subr.bf16.mxu0 0
  %555 = vmatpush1.bf16.msra.mxu0 0
  %556 = vmatprep.subr.bf16.mxu0 0
  %557 = vmatpush1.bf16.msra.mxu0 0
  %558 = vmatprep.subr.bf16.mxu0 0
  %559 = vmatpush1.bf16.msra.mxu0 0
  %560 = vmatprep.subr.bf16.mxu0 0
  %561 = vmatpush1.bf16.msra.mxu0 0
  %562 = vmatprep.subr.bf16.mxu0 0
  %563 = vmatpush1.bf16.msra.mxu0 0
  %564 = vmatprep.subr.bf16.mxu0 0
  %565 = vmatpush1.bf16.msra.mxu0 0
  %566 = vmatprep.subr.bf16.mxu0 0
  %567 = vmatpush1.bf16.msra.mxu0 0
  %568 = vmatprep.subr.bf16.mxu0 0
  %569 = vmatpush1.bf16.msra.mxu0 0
  %570 = vmatprep.subr.bf16.mxu0 0
  %571 = vmatpush1.bf16.msra.mxu0 0
  %572 = vmatprep.subr.bf16.mxu0 0
  %573 = vmatpush1.bf16.msra.mxu0 0
  %574 = vmatprep.subr.bf16.mxu0 0
  %575 = vmatpush1.bf16.msra.mxu0 0
  %576 = vmatprep.subr.bf16.mxu0 0
  %577 = vmatpush1.bf16.msra.mxu0 0
  %578 = vmatprep.mubr.bf16.mxu0 0
  %579 = vmatmul.mubr.bf16.gmra.mrb[0].mxu0 %v541
  %v580 = vpop.f32.mrb[0].mxu0
  %v581 = vadd.f32 0.0, %v580
  %v582 = vpop.f32.mrb[0].mxu0
  %v583 = vadd.f32 0.0, %v582
  %v584 = vpop.f32.mrb[0].mxu0
  %v585 = vadd.f32 0.0, %v584
  %v586 = vpop.f32.mrb[0].mxu0
  %v587 = vadd.f32 0.0, %v586
  %588 = vmatprep.mubr.bf16.mxu0 0
  %589 = vmatmul.mubr.bf16.gmra.mrb[0].mxu0 %v544
  %v590 = vpop.f32.mrb[0].mxu0
  %v591 = vadd.f32 0.0, %v590
  %v592 = vpop.f32.mrb[0].mxu0
  %v593 = vadd.f32 0.0, %v592
  %v594 = vpop.f32.mrb[0].mxu0
  %v595 = vadd.f32 0.0, %v594
  %v596 = vpop.f32.mrb[0].mxu0
  %v597 = vadd.f32 0.0, %v596
  %598 = vdwg.mxu0
  %599 = vmatprep.subr.bf16.mxu0 %v529
  %600 = vmatpush1.bf16.msra.mxu0 %v528
  %601 = vmatprep.subr.bf16.mxu0 0
  %602 = vmatpush1.bf16.msra.mxu0 0
  %603 = vmatprep.subr.bf16.mxu0 0
  %604 = vmatpush1.bf16.msra.mxu0 0
  %605 = vmatprep.subr.bf16.mxu0 0
  %606 = vmatpush1.bf16.msra.mxu0 0
  %607 = vmatprep.subr.bf16.mxu0 0
  %608 = vmatpush1.bf16.msra.mxu0 0
  %609 = vmatprep.subr.bf16.mxu0 0
  %610 = vmatpush1.bf16.msra.mxu0 0
  %611 = vmatprep.subr.bf16.mxu0 0
  %612 = vmatpush1.bf16.msra.mxu0 0
  %613 = vmatprep.subr.bf16.mxu0 0
  %614 = vmatpush1.bf16.msra.mxu0 0
  %615 = vmatprep.subr.bf16.mxu0 0
  %616 = vmatpush1.bf16.msra.mxu0 0
  %617 = vmatprep.subr.bf16.mxu0 0
  %618 = vmatpush1.bf16.msra.mxu0 0
  %619 = vmatprep.subr.bf16.mxu0 0
  %620 = vmatpush1.bf16.msra.mxu0 0
  %621 = vmatprep.subr.bf16.mxu0 0
  %622 = vmatpush1.bf16.msra.mxu0 0
  %623 = vmatprep.subr.bf16.mxu0 0
  %624 = vmatpush1.bf16.msra.mxu0 0
  %625 = vmatprep.subr.bf16.mxu0 0
  %626 = vmatpush1.bf16.msra.mxu0 0
  %627 = vmatprep.subr.bf16.mxu0 0
  %628 = vmatpush1.bf16.msra.mxu0 0
  %629 = vmatprep.subr.bf16.mxu0 0
  %630 = vmatpush1.bf16.msra.mxu0 0
  %631 = vmatprep.mubr.bf16.mxu0 0
  %632 = vmatmul.mubr.bf16.gmra.mrb[0].mxu0 %v541
  %v633 = vpop.f32.mrb[0].mxu0
  %v634 = vadd.f32 0.0, %v633
  %v635 = vpop.f32.mrb[0].mxu0
  %v636 = vadd.f32 0.0, %v635
  %v637 = vpop.f32.mrb[0].mxu0
  %v638 = vadd.f32 0.0, %v637
  %v639 = vpop.f32.mrb[0].mxu0
  %v640 = vadd.f32 0.0, %v639
  %641 = vmatprep.mubr.bf16.mxu0 0
  %642 = vmatmul.mubr.bf16.gmra.mrb[0].mxu0 %v544
  %v643 = vpop.f32.mrb[0].mxu0
  %v644 = vadd.f32 0.0, %v643
  %v645 = vpop.f32.mrb[0].mxu0
  %v646 = vadd.f32 0.0, %v645
  %v647 = vpop.f32.mrb[0].mxu0
  %v648 = vadd.f32 0.0, %v647
  %v649 = vpop.f32.mrb[0].mxu0
  %v650 = vadd.f32 0.0, %v649
  %651 = vdwg.mxu0
  %v656 = vunpack.c.l.b16 %v510
  %v657 = vunpack.c.l.b16 %v511
  %v658 = vunpack.c.l.b16 %v512
  %v659 = vunpack.c.l.b16 %v513
  %v660 = vpack.c.b16 %v657, %v656
  %v661 = vpack.c.b16 %v659, %v658
  %v670 = vunpack.c.l.b16 %v514
  %v671 = vunpack.c.h.b16 %v514
  %v672 = vunpack.c.l.b16 %v515
  %v673 = vunpack.c.h.b16 %v515
  %v674 = vunpack.c.l.b16 %v516
  %v675 = vunpack.c.h.b16 %v516
  %v676 = vunpack.c.l.b16 %v517
  %v677 = vunpack.c.h.b16 %v517
  %v678 = vunpack.c.l.b16 %v518
  %v679 = vunpack.c.h.b16 %v518
  %v680 = vunpack.c.l.b16 %v519
  %v681 = vunpack.c.h.b16 %v519
  %v682 = vunpack.c.l.b16 %v520
  %v683 = vunpack.c.h.b16 %v520
  %v684 = vunpack.c.l.b16 %v521
  %v685 = vunpack.c.h.b16 %v521
  %v686 = vpack.c.b16 %v674, %v670
  %v687 = vpack.c.b16 %v675, %v671
  %v688 = vpack.c.b16 %v676, %v672
  %v689 = vpack.c.b16 %v677, %v673
  %v690 = vpack.c.b16 %v682, %v678
  %v691 = vpack.c.b16 %v683, %v679
  %v692 = vpack.c.b16 %v684, %v680
  %v693 = vpack.c.b16 %v685, %v681
  %vm702 = vcmask 261120
  %v704 = vsel %vm702, %v660, 0
  %v707 = vsel %vm702, %v661, 0
  %709 = vmatprep.subr.bf16.mxu0 %v687
  %710 = vmatpush1.bf16.msra.mxu0 %v686
  %711 = vmatprep.subr.bf16.mxu0 %v691
  %712 = vmatpush1.bf16.msra.mxu0 %v690
  %713 = vmatprep.subr.bf16.mxu0 0
  %714 = vmatpush1.bf16.msra.mxu0 0
  %715 = vmatprep.subr.bf16.mxu0 0
  %716 = vmatpush1.bf16.msra.mxu0 0
  %717 = vmatprep.subr.bf16.mxu0 0
  %718 = vmatpush1.bf16.msra.mxu0 0
  %719 = vmatprep.subr.bf16.mxu0 0
  %720 = vmatpush1.bf16.msra.mxu0 0
  %721 = vmatprep.subr.bf16.mxu0 0
  %722 = vmatpush1.bf16.msra.mxu0 0
  %723 = vmatprep.subr.bf16.mxu0 0
  %724 = vmatpush1.bf16.msra.mxu0 0
  %725 = vmatprep.subr.bf16.mxu0 0
  %726 = vmatpush1.bf16.msra.mxu0 0
  %727 = vmatprep.subr.bf16.mxu0 0
  %728 = vmatpush1.bf16.msra.mxu0 0
  %729 = vmatprep.subr.bf16.mxu0 0
  %730 = vmatpush1.bf16.msra.mxu0 0
  %731 = vmatprep.subr.bf16.mxu0 0
  %732 = vmatpush1.bf16.msra.mxu0 0
  %733 = vmatprep.subr.bf16.mxu0 0
  %734 = vmatpush1.bf16.msra.mxu0 0
  %735 = vmatprep.subr.bf16.mxu0 0
  %736 = vmatpush1.bf16.msra.mxu0 0
  %737 = vmatprep.subr.bf16.mxu0 0
  %738 = vmatpush1.bf16.msra.mxu0 0
  %739 = vmatprep.subr.bf16.mxu0 0
  %740 = vmatpush1.bf16.msra.mxu0 0
  %741 = vmatprep.mubr.bf16.mxu0 0
  %742 = vmatmul.mubr.bf16.gmra.mrb[0].mxu0 %v704
  %v743 = vpop.f32.mrb[0].mxu0
  %v744 = vadd.f32 %v581, %v743
  %v745 = vpop.f32.mrb[0].mxu0
  %v746 = vadd.f32 %v583, %v745
  %v747 = vpop.f32.mrb[0].mxu0
  %v748 = vadd.f32 %v585, %v747
  %v749 = vpop.f32.mrb[0].mxu0
  %v750 = vadd.f32 %v587, %v749
  %751 = vmatprep.mubr.bf16.mxu0 0
  %752 = vmatmul.mubr.bf16.gmra.mrb[0].mxu0 %v707
  %v753 = vpop.f32.mrb[0].mxu0
  %v754 = vadd.f32 %v591, %v753
  %v755 = vpop.f32.mrb[0].mxu0
  %v756 = vadd.f32 %v593, %v755
  %v757 = vpop.f32.mrb[0].mxu0
  %v758 = vadd.f32 %v595, %v757
  %v759 = vpop.f32.mrb[0].mxu0
  %v760 = vadd.f32 %v597, %v759
  %761 = vdwg.mxu0
  %762 = vmatprep.subr.bf16.mxu0 %v689
  %763 = vmatpush1.bf16.msra.mxu0 %v688
  %764 = vmatprep.subr.bf16.mxu0 %v693
  %765 = vmatpush1.bf16.msra.mxu0 %v692
  %766 = vmatprep.subr.bf16.mxu0 0
  %767 = vmatpush1.bf16.msra.mxu0 0
  %768 = vmatprep.subr.bf16.mxu0 0
  %769 = vmatpush1.bf16.msra.mxu0 0
  %770 = vmatprep.subr.bf16.mxu0 0
  %771 = vmatpush1.bf16.msra.mxu0 0
  %772 = vmatprep.subr.bf16.mxu0 0
  %773 = vmatpush1.bf16.msra.mxu0 0
  %774 = vmatprep.subr.bf16.mxu0 0
  %775 = vmatpush1.bf16.msra.mxu0 0
  %776 = vmatprep.subr.bf16.mxu0 0
  %777 = vmatpush1.bf16.msra.mxu0 0
  %778 = vmatprep.subr.bf16.mxu0 0
  %779 = vmatpush1.bf16.msra.mxu0 0
  %780 = vmatprep.subr.bf16.mxu0 0
  %781 = vmatpush1.bf16.msra.mxu0 0
  %782 = vmatprep.subr.bf16.mxu0 0
  %783 = vmatpush1.bf16.msra.mxu0 0
  %784 = vmatprep.subr.bf16.mxu0 0
  %785 = vmatpush1.bf16.msra.mxu0 0
  %786 = vmatprep.subr.bf16.mxu0 0
  %787 = vmatpush1.bf16.msra.mxu0 0
  %788 = vmatprep.subr.bf16.mxu0 0
  %789 = vmatpush1.bf16.msra.mxu0 0
  %790 = vmatprep.subr.bf16.mxu0 0
  %791 = vmatpush1.bf16.msra.mxu0 0
  %792 = vmatprep.subr.bf16.mxu0 0
  %793 = vmatpush1.bf16.msra.mxu0 0
  %794 = vmatprep.mubr.bf16.mxu0 0
  %795 = vmatmul.mubr.bf16.gmra.mrb[0].mxu0 %v704
  %v796 = vpop.f32.mrb[0].mxu0
  %v797 = vadd.f32 %v634, %v796
  %v798 = vpop.f32.mrb[0].mxu0
  %v799 = vadd.f32 %v636, %v798
  %v800 = vpop.f32.mrb[0].mxu0
  %v801 = vadd.f32 %v638, %v800
  %v802 = vpop.f32.mrb[0].mxu0
  %v803 = vadd.f32 %v640, %v802
  %804 = vmatprep.mubr.bf16.mxu0 0
  %805 = vmatmul.mubr.bf16.gmra.mrb[0].mxu0 %v707
  %v806 = vpop.f32.mrb[0].mxu0
  %v807 = vadd.f32 %v644, %v806
  %v808 = vpop.f32.mrb[0].mxu0
  %v809 = vadd.f32 %v646, %v808
  %v810 = vpop.f32.mrb[0].mxu0
  %v811 = vadd.f32 %v648, %v810
  %v812 = vpop.f32.mrb[0].mxu0
  %v813 = vadd.f32 %v650, %v812
  %814 = vdwg.mxu0
  %v815 = vld [vmem:[%s8] sm:$0xff]
  %v816 = vld [vmem:[%s8 + $0x8] sm:$0xff]
  %v817 = vld [vmem:[%s8 + $0x10] sm:$0xff]
  %v818 = vld [vmem:[%s8 + $0x18] sm:$0xff]
  %v819 = vld [vmem:[%s9] sm:$0xff]
  %v820 = vld [vmem:[%s9 + $0x8] sm:$0xff]
  %v821 = vld [vmem:[%s9 + $0x10] sm:$0xff]
  %v822 = vld [vmem:[%s9 + $0x18] sm:$0xff]
  %v823 = vld [vmem:[%s10] sm:$0xff]
  %v824 = vld [vmem:[%s10 + $0x8] sm:$0xff]
  %v825 = vld [vmem:[%s10 + $0x10] sm:$0xff]
  %v826 = vld [vmem:[%s10 + $0x18] sm:$0xff]
  %v827 = vadd.f32 %v744, %v746
  %v828 = vadd.f32 %v827, %v797
  %v829 = vadd.f32 %v828, %v799
  %830 = vadd.xlane.f32.xlu0 %v829
  %v831 = vpop.xlane.xlu0 %830
  %v832 = vadd.f32 %v748, %v750
  %v833 = vadd.f32 %v832, %v801
  %v834 = vadd.f32 %v833, %v803
  %835 = vadd.xlane.f32.xlu0 %v834
  %v836 = vpop.xlane.xlu0 %835
  %v837 = vadd.f32 %v754, %v756
  %v838 = vadd.f32 %v837, %v807
  %v839 = vadd.f32 %v838, %v809
  %840 = vadd.xlane.f32.xlu0 %v839
  %v841 = vpop.xlane.xlu0 %840
  %v842 = vadd.f32 %v758, %v760
  %v843 = vadd.f32 %v842, %v811
  %v844 = vadd.f32 %v843, %v813
  %845 = vadd.xlane.f32.xlu0 %v844
  %v846 = vpop.xlane.xlu0 %845
  %v847 = vmul.f32 %v744, %v744
  %v848 = vmul.f32 %v746, %v746
  %v849 = vmul.f32 %v797, %v797
  %v850 = vmul.f32 %v799, %v799
  %v851 = vmul.f32 %v748, %v748
  %v852 = vmul.f32 %v750, %v750
  %v853 = vmul.f32 %v801, %v801
  %v854 = vmul.f32 %v803, %v803
  %v855 = vmul.f32 %v754, %v754
  %v856 = vmul.f32 %v756, %v756
  %v857 = vmul.f32 %v807, %v807
  %v858 = vmul.f32 %v809, %v809
  %v859 = vmul.f32 %v758, %v758
  %v860 = vmul.f32 %v760, %v760
  %v861 = vmul.f32 %v811, %v811
  %v862 = vmul.f32 %v813, %v813
  %v863 = vadd.f32 %v847, %v848
  %v864 = vadd.f32 %v863, %v849
  %v865 = vadd.f32 %v864, %v850
  %866 = vadd.xlane.f32.xlu0 %v865
  %v867 = vpop.xlane.xlu0 %866
  %v868 = vadd.f32 %v851, %v852
  %v869 = vadd.f32 %v868, %v853
  %v870 = vadd.f32 %v869, %v854
  %871 = vadd.xlane.f32.xlu0 %v870
  %v872 = vpop.xlane.xlu0 %871
  %v873 = vadd.f32 %v855, %v856
  %v874 = vadd.f32 %v873, %v857
  %v875 = vadd.f32 %v874, %v858
  %876 = vadd.xlane.f32.xlu0 %v875
  %v877 = vpop.xlane.xlu0 %876
  %v878 = vadd.f32 %v859, %v860
  %v879 = vadd.f32 %v878, %v861
  %v880 = vadd.f32 %v879, %v862
  %881 = vadd.xlane.f32.xlu0 %v880
  %v882 = vpop.xlane.xlu0 %881
  %v884 = vsel %vm702, %v823, 0
  %v887 = vsel %vm702, %v824, 0
  %v890 = vsel %vm702, %v825, 0
  %v893 = vsel %vm702, %v826, 0
  %895 = vmatprep.subr.mxu0 0.0
  %896 = vmatpush1.msra.mxu0 %v831
  %897 = vmatprep.subr.mxu0 0.0
  %898 = vmatpush1.msra.mxu0 %v836
  %899 = vmatprep.subr.mxu0 0.0
  %900 = vmatpush1.msra.mxu0 %v841
  %901 = vmatprep.subr.mxu0 0.0
  %902 = vmatpush1.msra.mxu0 %v846
  %903 = vmatprep.subr.mxu0 0.0
  %904 = vmatpush1.msra.mxu0 0.0
  %905 = vmatprep.subr.mxu0 0.0
  %906 = vmatpush1.msra.mxu0 0.0
  %907 = vmatprep.subr.mxu0 0.0
  %908 = vmatpush1.msra.mxu0 0.0
  %909 = vmatprep.subr.mxu0 0.0
  %910 = vmatpush1.msra.mxu0 0.0
  %911 = vmatprep.subr.mxu0 0.0
  %912 = vmatpush1.msra.mxu0 0.0
  %913 = vmatprep.subr.mxu0 0.0
  %914 = vmatpush1.msra.mxu0 0.0
  %915 = vmatprep.subr.mxu0 0.0
  %916 = vmatpush1.msra.mxu0 0.0
  %917 = vmatprep.subr.mxu0 0.0
  %918 = vmatpush1.msra.mxu0 0.0
  %919 = vmatprep.subr.mxu0 0.0
  %920 = vmatpush1.msra.mxu0 0.0
  %921 = vmatprep.subr.mxu0 0.0
  %922 = vmatpush1.msra.mxu0 0.0
  %923 = vmatprep.subr.mxu0 0.0
  %924 = vmatpush1.msra.mxu0 0.0
  %925 = vmatprep.subr.mxu0 0.0
  %926 = vmatpush1.msra.mxu0 0.0
  %927 = vmatprep.subr.mxu0 0.0
  %928 = vmatpush1.msra.mxu0 0.0
  %929 = vmatprep.subr.mxu0 0.0
  %930 = vmatpush1.msra.mxu0 0.0
  %931 = vmatprep.subr.mxu0 0.0
  %932 = vmatpush1.msra.mxu0 0.0
  %933 = vmatprep.subr.mxu0 0.0
  %934 = vmatpush1.msra.mxu0 0.0
  %935 = vmatprep.subr.mxu0 0.0
  %936 = vmatpush1.msra.mxu0 0.0
  %937 = vmatprep.subr.mxu0 0.0
  %938 = vmatpush1.msra.mxu0 0.0
  %939 = vmatprep.subr.mxu0 0.0
  %940 = vmatpush1.msra.mxu0 0.0
  %941 = vmatprep.subr.mxu0 0.0
  %942 = vmatpush1.msra.mxu0 0.0
  %943 = vmatprep.subr.mxu0 0.0
  %944 = vmatpush1.msra.mxu0 0.0
  %945 = vmatprep.subr.mxu0 0.0
  %946 = vmatpush1.msra.mxu0 0.0
  %947 = vmatprep.subr.mxu0 0.0
  %948 = vmatpush1.msra.mxu0 0.0
  %949 = vmatprep.subr.mxu0 0.0
  %950 = vmatpush1.msra.mxu0 0.0
  %951 = vmatprep.subr.mxu0 0.0
  %952 = vmatpush1.msra.mxu0 0.0
  %953 = vmatprep.subr.mxu0 0.0
  %954 = vmatpush1.msra.mxu0 0.0
  %955 = vmatprep.subr.mxu0 0.0
  %956 = vmatpush1.msra.mxu0 0.0
  %957 = vmatprep.subr.mxu0 0.0
  %958 = vmatpush1.msra.mxu0 0.0
  %959 = vmatprep.mubr.f32.mxu0 0.0
  %960 = vmatmul.mubr.f32.gmra.mrb[0].mxu0 %v884
  %v961 = vpop.f32.mrb[0].mxu0
  %v962 = vadd.f32 0.0, %v961
  %v963 = vpop.f32.mrb[0].mxu0
  %964 = vmatprep.mubr.f32.mxu0 0.0
  %965 = vmatmul.mubr.f32.gmra.mrb[0].mxu0 %v887
  %v966 = vpop.f32.mrb[0].mxu0
  %v967 = vadd.f32 0.0, %v966
  %v968 = vpop.f32.mrb[0].mxu0
  %969 = vmatprep.mubr.f32.mxu0 0.0
  %970 = vmatmul.mubr.f32.gmra.mrb[0].mxu0 %v890
  %v971 = vpop.f32.mrb[0].mxu0
  %v972 = vadd.f32 0.0, %v971
  %v973 = vpop.f32.mrb[0].mxu0
  %974 = vmatprep.mubr.f32.mxu0 0.0
  %975 = vmatmul.mubr.f32.gmra.mrb[0].mxu0 %v893
  %v976 = vpop.f32.mrb[0].mxu0
  %v977 = vadd.f32 0.0, %v976
  %v978 = vpop.f32.mrb[0].mxu0
  %979 = vdwg.mxu0
  %v980 = vmul.f32 %v962, 0.00048828125
  %v981 = vmul.f32 %v967, 0.00048828125
  %v982 = vmul.f32 %v972, 0.00048828125
  %v983 = vmul.f32 %v977, 0.00048828125
  %984 = vmatprep.subr.mxu0 0.0
  %985 = vmatpush1.msra.mxu0 %v867
  %986 = vmatprep.subr.mxu0 0.0
  %987 = vmatpush1.msra.mxu0 %v872
  %988 = vmatprep.subr.mxu0 0.0
  %989 = vmatpush1.msra.mxu0 %v877
  %990 = vmatprep.subr.mxu0 0.0
  %991 = vmatpush1.msra.mxu0 %v882
  %992 = vmatprep.subr.mxu0 0.0
  %993 = vmatpush1.msra.mxu0 0.0
  %994 = vmatprep.subr.mxu0 0.0
  %995 = vmatpush1.msra.mxu0 0.0
  %996 = vmatprep.subr.mxu0 0.0
  %997 = vmatpush1.msra.mxu0 0.0
  %998 = vmatprep.subr.mxu0 0.0
  %999 = vmatpush1.msra.mxu0 0.0
  %1000 = vmatprep.subr.mxu0 0.0
  %1001 = vmatpush1.msra.mxu0 0.0
  %1002 = vmatprep.subr.mxu0 0.0
  %1003 = vmatpush1.msra.mxu0 0.0
  %1004 = vmatprep.subr.mxu0 0.0
  %1005 = vmatpush1.msra.mxu0 0.0
  %1006 = vmatprep.subr.mxu0 0.0
  %1007 = vmatpush1.msra.mxu0 0.0
  %1008 = vmatprep.subr.mxu0 0.0
  %1009 = vmatpush1.msra.mxu0 0.0
  %1010 = vmatprep.subr.mxu0 0.0
  %1011 = vmatpush1.msra.mxu0 0.0
  %1012 = vmatprep.subr.mxu0 0.0
  %1013 = vmatpush1.msra.mxu0 0.0
  %1014 = vmatprep.subr.mxu0 0.0
  %1015 = vmatpush1.msra.mxu0 0.0
  %1016 = vmatprep.subr.mxu0 0.0
  %1017 = vmatpush1.msra.mxu0 0.0
  %1018 = vmatprep.subr.mxu0 0.0
  %1019 = vmatpush1.msra.mxu0 0.0
  %1020 = vmatprep.subr.mxu0 0.0
  %1021 = vmatpush1.msra.mxu0 0.0
  %1022 = vmatprep.subr.mxu0 0.0
  %1023 = vmatpush1.msra.mxu0 0.0
  %1024 = vmatprep.subr.mxu0 0.0
  %1025 = vmatpush1.msra.mxu0 0.0
  %1026 = vmatprep.subr.mxu0 0.0
  %1027 = vmatpush1.msra.mxu0 0.0
  %1028 = vmatprep.subr.mxu0 0.0
  %1029 = vmatpush1.msra.mxu0 0.0
  %1030 = vmatprep.subr.mxu0 0.0
  %1031 = vmatpush1.msra.mxu0 0.0
  %1032 = vmatprep.subr.mxu0 0.0
  %1033 = vmatpush1.msra.mxu0 0.0
  %1034 = vmatprep.subr.mxu0 0.0
  %1035 = vmatpush1.msra.mxu0 0.0
  %1036 = vmatprep.subr.mxu0 0.0
  %1037 = vmatpush1.msra.mxu0 0.0
  %1038 = vmatprep.subr.mxu0 0.0
  %1039 = vmatpush1.msra.mxu0 0.0
  %1040 = vmatprep.subr.mxu0 0.0
  %1041 = vmatpush1.msra.mxu0 0.0
  %1042 = vmatprep.subr.mxu0 0.0
  %1043 = vmatpush1.msra.mxu0 0.0
  %1044 = vmatprep.subr.mxu0 0.0
  %1045 = vmatpush1.msra.mxu0 0.0
  %1046 = vmatprep.subr.mxu0 0.0
  %1047 = vmatpush1.msra.mxu0 0.0
  %1048 = vmatprep.mubr.f32.mxu0 0.0
  %1049 = vmatmul.mubr.f32.gmra.mrb[0].mxu0 %v884
  %v1050 = vpop.f32.mrb[0].mxu0
  %v1051 = vadd.f32 0.0, %v1050
  %v1052 = vpop.f32.mrb[0].mxu0
  %1053 = vmatprep.mubr.f32.mxu0 0.0
  %1054 = vmatmul.mubr.f32.gmra.mrb[0].mxu0 %v887
  %v1055 = vpop.f32.mrb[0].mxu0
  %v1056 = vadd.f32 0.0, %v1055
  %v1057 = vpop.f32.mrb[0].mxu0
  %1058 = vmatprep.mubr.f32.mxu0 0.0
  %1059 = vmatmul.mubr.f32.gmra.mrb[0].mxu0 %v890
  %v1060 = vpop.f32.mrb[0].mxu0
  %v1061 = vadd.f32 0.0, %v1060
  %v1062 = vpop.f32.mrb[0].mxu0
  %1063 = vmatprep.mubr.f32.mxu0 0.0
  %1064 = vmatmul.mubr.f32.gmra.mrb[0].mxu0 %v893
  %v1065 = vpop.f32.mrb[0].mxu0
  %v1066 = vadd.f32 0.0, %v1065
  %v1067 = vpop.f32.mrb[0].mxu0
  %1068 = vdwg.mxu0
  %v1069 = vmul.f32 %v1051, 0.00048828125
  %v1070 = vmul.f32 %v1056, 0.00048828125
  %v1071 = vmul.f32 %v1061, 0.00048828125
  %v1072 = vmul.f32 %v1066, 0.00048828125
  %v1073 = vmul.f32 %v980, %v980
  %v1074 = vmul.f32 %v981, %v981
  %v1075 = vmul.f32 %v982, %v982
  %v1076 = vmul.f32 %v983, %v983
  %v1077 = vsub.f32 %v1069, %v1073
  %v1078 = vsub.f32 %v1070, %v1074
  %v1079 = vsub.f32 %v1071, %v1075
  %v1080 = vsub.f32 %v1072, %v1076
  %v1081 = vadd.f32 %v1077, 1e-05
  %v1082 = vadd.f32 %v1078, 1e-05
  %v1083 = vadd.f32 %v1079, 1e-05
  %v1084 = vadd.f32 %v1080, 1e-05
  %v1085 = vrsqrt.pop %v1081
  %v1086 = vrsqrt.pop %v1082
  %v1087 = vrsqrt.pop %v1083
  %v1088 = vrsqrt.pop %v1084
  %v1089 = vmul.f32 %v815, %v1085
  %v1090 = vmul.f32 %v816, %v1086
  %v1091 = vmul.f32 %v817, %v1087
  %v1092 = vmul.f32 %v818, %v1088
  %v1093 = vmul.f32 %v980, %v1089
  %v1094 = vmul.f32 %v981, %v1090
  %v1095 = vmul.f32 %v982, %v1091
  %v1096 = vmul.f32 %v983, %v1092
  %v1097 = vsub.f32 %v819, %v1093
  %v1098 = vsub.f32 %v820, %v1094
  %v1099 = vsub.f32 %v821, %v1095
  %v1100 = vsub.f32 %v822, %v1096
  %1102 = vset.pattern.permute.xlu0 0
  %1103 = vperm.xlu0 %1102, %v1089
  %v1104 = vpop.permute.xlu0 %1103
  %1107 = vset.pattern.permute.xlu0 0
  %1108 = vperm.xlu0 %1107, %v1090
  %v1109 = vpop.permute.xlu0 %1108
  %1112 = vset.pattern.permute.xlu0 0
  %1113 = vperm.xlu0 %1112, %v1091
  %v1114 = vpop.permute.xlu0 %1113
  %1117 = vset.pattern.permute.xlu0 0
  %1118 = vperm.xlu0 %1117, %v1092
  %v1119 = vpop.permute.xlu0 %1118
  %v1121 = vmul.f32 %v744, %v1104
  %v1122 = vmul.f32 %v746, %v1104
  %v1123 = vmul.f32 %v797, %v1104
  %v1124 = vmul.f32 %v799, %v1104
  %v1125 = vmul.f32 %v748, %v1109
  %v1126 = vmul.f32 %v750, %v1109
  %v1127 = vmul.f32 %v801, %v1109
  %v1128 = vmul.f32 %v803, %v1109
  %v1129 = vmul.f32 %v754, %v1114
  %v1130 = vmul.f32 %v756, %v1114
  %v1131 = vmul.f32 %v807, %v1114
  %v1132 = vmul.f32 %v809, %v1114
  %v1133 = vmul.f32 %v758, %v1119
  %v1134 = vmul.f32 %v760, %v1119
  %v1135 = vmul.f32 %v811, %v1119
  %v1136 = vmul.f32 %v813, %v1119
  %1138 = vset.pattern.permute.xlu0 0
  %1139 = vperm.xlu0 %1138, %v1097
  %v1140 = vpop.permute.xlu0 %1139
  %1143 = vset.pattern.permute.xlu0 0
  %1144 = vperm.xlu0 %1143, %v1098
  %v1145 = vpop.permute.xlu0 %1144
  %1148 = vset.pattern.permute.xlu0 0
  %1149 = vperm.xlu0 %1148, %v1099
  %v1150 = vpop.permute.xlu0 %1149
  %1153 = vset.pattern.permute.xlu0 0
  %1154 = vperm.xlu0 %1153, %v1100
  %v1155 = vpop.permute.xlu0 %1154
  %v1157 = vadd.f32 %v1121, %v1140
  %v1158 = vadd.f32 %v1122, %v1140
  %v1159 = vadd.f32 %v1123, %v1140
  %v1160 = vadd.f32 %v1124, %v1140
  %v1161 = vadd.f32 %v1125, %v1145
  %v1162 = vadd.f32 %v1126, %v1145
  %v1163 = vadd.f32 %v1127, %v1145
  %v1164 = vadd.f32 %v1128, %v1145
  %v1165 = vadd.f32 %v1129, %v1150
  %v1166 = vadd.f32 %v1130, %v1150
  %v1167 = vadd.f32 %v1131, %v1150
  %v1168 = vadd.f32 %v1132, %v1150
  %v1169 = vadd.f32 %v1133, %v1155
  %v1170 = vadd.f32 %v1134, %v1155
  %v1171 = vadd.f32 %v1135, %v1155
  %v1172 = vadd.f32 %v1136, %v1155
  %1173 = vst [vmem:[%s11] sm:$0xff] %v1157
  %1174 = vst [vmem:[%s11 + $0x8] sm:$0xff] %v1158
  %1175 = vst [vmem:[%s11 + $0x10] sm:$0xff] %v1159
  %1176 = vst [vmem:[%s11 + $0x18] sm:$0xff] %v1160
  %1177 = vst [vmem:[%s11 + $0x20] sm:$0xff] %v1161
  %1178 = vst [vmem:[%s11 + $0x28] sm:$0xff] %v1162
  %1179 = vst [vmem:[%s11 + $0x30] sm:$0xff] %v1163
  %1180 = vst [vmem:[%s11 + $0x38] sm:$0xff] %v1164
  %1181 = vst [vmem:[%s11 + $0x40] sm:$0xff] %v1165
  %1182 = vst [vmem:[%s11 + $0x48] sm:$0xff] %v1166
  %1183 = vst [vmem:[%s11 + $0x50] sm:$0xff] %v1167
  %1184 = vst [vmem:[%s11 + $0x58] sm:$0xff] %v1168
  %1185 = vst [vmem:[%s11 + $0x60] sm:$0xff] %v1169
  %1186 = vst [vmem:[%s11 + $0x68] sm:$0xff] %v1170
  %1187 = vst [vmem:[%s11 + $0x70] sm:$0xff] %v1171
  %1188 = vst [vmem:[%s11 + $0x78] sm:$0xff] %v1172
  // Predicated region
  $region46: #{multi_modal_block.5} parent=0 // pred_check
    _
  $region47: #{multi_modal_block.5} parent=0 // pred_check_branch
    %1190 = sbr.rel (0) target = $region49
  $region48: #{multi_modal_block.5} parent=0 // pred_region
    _
  $region49: #{multi_modal_block.5} parent=0 // pred_fallthru
    _
  // Predicated region
  $region50: #{multi_modal_block.5} parent=0 // pred_check
    _
  $region51: #{multi_modal_block.5} parent=0 // pred_check_branch
    %1192 = sbr.rel (0) target = $region53
  $region52: #{multi_modal_block.5} parent=0 // pred_region
    _
  $region53: #{multi_modal_block.5} parent=0 // pred_fallthru
    _

</llo_original>
